<compile_context>
chip_gen: v7x
topology: tpu7x:2x2x1
jax: 0.10.0
libtpu: 0.0.40
codegen_flags: <defaults>
</compile_context>

<pallas_src>
import functools

import jax
import jax.numpy as jnp
from jax.experimental import pallas as pl
from jax.experimental.pallas import tpu as pltpu


def _pad_to(v, m):
    return ((v + m - 1) // m) * m


# ----------------------- kernel 1: feature transform ----------------------- #
def _xw_kernel(x_ref, w_ref, o_ref):
    o_ref[...] = jnp.dot(
        x_ref[...], w_ref[...], preferred_element_type=jnp.float32
    ).astype(o_ref.dtype)


def feature_transform(x, w, *, tm=256):
    """XW = X @ W, tiled over rows of X. Shapes must already be padded."""
    n, f = x.shape
    h = w.shape[1]
    return pl.pallas_call(
        _xw_kernel,
        out_shape=jax.ShapeDtypeStruct((n, h), x.dtype),
        grid_spec=pltpu.PrefetchScalarGridSpec(
            num_scalar_prefetch=0,
            grid=(n // tm,),
            in_specs=[
                pl.BlockSpec((tm, f), lambda i: (i, 0)),
                pl.BlockSpec((f, h), lambda i: (0, 0)),   # W resident in VMEM
            ],
            out_specs=pl.BlockSpec((tm, h), lambda i: (i, 0)),
        ),
        compiler_params=pltpu.CompilerParams(
            dimension_semantics=("parallel",),
            vmem_limit_bytes=48 * 1024 * 1024,
        ),
    )(x, w)


# ------------------- kernel 2: aggregation + fused epilogue ---------------- #
def _agg_kernel(*refs, apply_tanh, has_dropout, fuse_w2, kt, tk):
    it = iter(refs)
    mask_ref = next(it)        # (mt*kt,) int32 in SMEM
    _rowt_ref = next(it)       # used only inside the A index_map
    _colt_ref = next(it)
    a_ref = next(it)           # (tm, tk) A_hat tile
    xw_ref = next(it)          # (n_p, h)  -- fully VMEM-resident
    b_ref = next(it)           # (1, h) f32 bias
    drop_ref = next(it) if has_dropout else None   # (tm, h) f32 dropout scale
    w2_ref = next(it) if fuse_w2 else None         # (h, c) fused second weight
    o_ref = next(it)
    acc_ref = next(it)         # (tm, h) f32 accumulator scratch

    i = pl.program_id(0)
    k = pl.program_id(1)

    @pl.when(k == 0)
    def _():
        acc_ref[...] = jnp.zeros_like(acc_ref)

    # Block-sparse skip. The A index table already made the DMA revisit the
    # previous block for zero tiles; this additionally skips the MXU work.
    # Correctness is preserved even if a stale block is resident, because the
    # matmul never runs for zero-mask tiles.
    @pl.when(mask_ref[i * kt + k] != 0)
    def _():
        kk = pl.multiple_of(k * tk, tk)
        acc_ref[...] += jnp.dot(
            a_ref[...], xw_ref[pl.ds(kk, tk), :],
            preferred_element_type=jnp.float32,
        )

    @pl.when(k == pl.num_programs(1) - 1)
    def _():
        h = acc_ref[...] + b_ref[...]          # f32, bias broadcast (1, h)
        if apply_tanh:
            h = jnp.tanh(h)
        if has_dropout:
            h = h * drop_ref[...]              # precomputed keep/(1-p) scale
        if fuse_w2:                            # fused layer-2 feature transform
            h = jnp.dot(h.astype(w2_ref.dtype), w2_ref[...],
                        preferred_element_type=jnp.float32)
        o_ref[...] = h.astype(o_ref.dtype)


def aggregate(a_p, xw, bias, mask_flat, row_tbl, col_tbl, *,
              apply_tanh, drop_scale=None, w2=None, out_dtype,
              tm=256, tk=256):
    """out = A_hat @ XW + b (+ optional tanh / dropout / @W2). Padded shapes."""
    n_p = a_p.shape[0]
    h = xw.shape[1]
    mt, kt = n_p // tm, n_p // tk
    has_dropout = drop_scale is not None
    fuse_w2 = w2 is not None
    out_w = w2.shape[1] if fuse_w2 else h

    in_specs = [
        # A tile: index driven by the scalar-prefetched fetch tables so zero
        # tiles revisit the previous block (DMA skipped by the pipeline).
        pl.BlockSpec((tm, tk),
                     lambda i, k, m, rt, ct: (rt[i * kt + k], ct[i * kt + k])),
        # XW: one full-array block, resident in VMEM across the whole grid.
        pl.BlockSpec((n_p, h), lambda i, k, m, rt, ct: (0, 0)),
        pl.BlockSpec((1, h), lambda i, k, m, rt, ct: (0, 0)),     # bias
    ]
    inputs = [a_p, xw, bias]
    if has_dropout:
        in_specs.append(pl.BlockSpec((tm, h), lambda i, k, m, rt, ct: (i, 0)))
        inputs.append(drop_scale)
    if fuse_w2:
        in_specs.append(
            pl.BlockSpec((w2.shape[0], out_w), lambda i, k, m, rt, ct: (0, 0)))
        inputs.append(w2)

    kernel = functools.partial(
        _agg_kernel, apply_tanh=apply_tanh, has_dropout=has_dropout,
        fuse_w2=fuse_w2, kt=kt, tk=tk)

    return pl.pallas_call(
        kernel,
        out_shape=jax.ShapeDtypeStruct((n_p, out_w), out_dtype),
        grid_spec=pltpu.PrefetchScalarGridSpec(
            num_scalar_prefetch=3,                  # mask, row_tbl, col_tbl
            grid=(mt, kt),
            in_specs=in_specs,
            out_specs=pl.BlockSpec((tm, out_w), lambda i, k, m, rt, ct: (i, 0)),
            scratch_shapes=[pltpu.VMEM((tm, h), jnp.float32)],
        ),
        compiler_params=pltpu.CompilerParams(
            # "parallel" row axis shards across TensorCores on megacore parts.
            dimension_semantics=("parallel", "arbitrary"),
            vmem_limit_bytes=48 * 1024 * 1024,      # fits v7x's 64 MiB VMEM
        ),
    )(mask_flat, row_tbl, col_tbl, *inputs)


# -------------------- per-graph precompute (done once) --------------------- #
def prepare_adjacency(a_hat, *, tm=256, tk=256, compute_dtype=jnp.bfloat16):
    """Pad A_hat and build the block-sparse mask / DMA fetch-index tables."""
    n = a_hat.shape[0]
    n_p = _pad_to(n, max(tm, tk))
    a_p = jnp.zeros((n_p, n_p), compute_dtype).at[:n, :n].set(
        a_hat.astype(compute_dtype))

    mt, kt = n_p // tm, n_p // tk
    blk = jnp.abs(a_p.astype(jnp.float32)).reshape(mt, tm, kt, tk).sum(axis=(1, 3))
    mask = (blk > 0.0).astype(jnp.int32).reshape(-1)          # grid order (i, k)

    # For each grid step, fetch the most recent nonzero block (carry forward),
    # so consecutive zero-mask steps return the same block index -> DMA skipped.
    steps = jnp.arange(mt * kt, dtype=jnp.int32)
    last_nz = jax.lax.cummax(jnp.where(mask != 0, steps, jnp.int32(-1)))
    fetch = jnp.where(last_nz >= 0, last_nz, steps).astype(jnp.int32)
    row_tbl = (fetch // kt).astype(jnp.int32)
    col_tbl = (fetch % kt).astype(jnp.int32)
    return a_p, mask, row_tbl, col_tbl, n_p


# ----------------------------- full forward -------------------------------- #
def gcn_forward(graph, x, w1, b1, w2, b2, *, p_drop=0.3, training=False,
                dropout_key=None, compute_dtype=jnp.bfloat16, tm=256, tk=256):
    """2-layer GCN forward. `graph` comes from prepare_adjacency (same tm/tk)."""
    a_p, mask, row_tbl, col_tbl, n_p = graph
    n, f = x.shape
    hidden = w1.shape[1]
    n_classes = w2.shape[1]
    f_p = _pad_to(f, 128)
    h_p = _pad_to(hidden, 128)
    c_p = _pad_to(n_classes, 128)

    # zero-pad to lane-dense / tile-aligned shapes (padding never leaks: padded
    # weight columns/rows are zero and the output is sliced back at the end)
    x_p = jnp.zeros((n_p, f_p), compute_dtype).at[:n, :f].set(
        x.astype(compute_dtype))
    w1_p = jnp.zeros((f_p, h_p), compute_dtype).at[:f, :hidden].set(
        w1.astype(compute_dtype))
    w2_p = jnp.zeros((h_p, c_p), compute_dtype).at[:hidden, :n_classes].set(
        w2.astype(compute_dtype))
    b1_p = jnp.zeros((1, h_p), jnp.float32).at[:, :hidden].set(
        jnp.reshape(b1, (1, -1)).astype(jnp.float32))
    b2_p = jnp.zeros((1, c_p), jnp.float32).at[:, :n_classes].set(
        jnp.reshape(b2, (1, -1)).astype(jnp.float32))

    # TODO(synk): in-kernel dropout RNG (pltpu.prng_*) has no CPU/interpret
    # lowering; the inverted-dropout scale mask is generated with jax.random
    # and streamed into the kernel epilogue instead.
    drop_scale = None
    if training and p_drop > 0.0:
        if dropout_key is None:
            dropout_key = jax.random.PRNGKey(0)
        keep = jax.random.bernoulli(dropout_key, 1.0 - p_drop, (n_p, h_p))
        drop_scale = keep.astype(jnp.float32) / (1.0 - p_drop)

    # layer 1 (fused epilogue): hw2 = dropout(tanh(A_hat @ (X @ W1) + b1)) @ W2
    xw1 = feature_transform(x_p, w1_p, tm=tm)
    hw2 = aggregate(a_p, xw1, b1_p, mask, row_tbl, col_tbl,
                    apply_tanh=True, drop_scale=drop_scale, w2=w2_p,
                    out_dtype=compute_dtype, tm=tm, tk=tk)

    # layer 2: out = A_hat @ hw2 + b2
    out = aggregate(a_p, hw2, b2_p, mask, row_tbl, col_tbl,
                    apply_tanh=False, drop_scale=None, w2=None,
                    out_dtype=jnp.float32, tm=tm, tk=tk)

    return out[:n, :n_classes]


# ------------------------------- JAX glue ---------------------------------- #
def build_normalized_adjacency(edge_index, num_nodes):
    """Dense A_hat = D^{-1/2}(A + I)D^{-1/2} following PyG gcn_norm."""
    row, col = edge_index
    loop = jnp.arange(num_nodes, dtype=edge_index.dtype)
    row = jnp.concatenate([row, loop])
    col = jnp.concatenate([col, loop])
    a = jnp.zeros((num_nodes, num_nodes), jnp.float32).at[col, row].add(1.0)
    deg = a.sum(axis=1)
    dinv = jnp.where(deg > 0, 1.0 / jnp.sqrt(deg), 0.0)
    return dinv[:, None] * a * dinv[None, :]


def glorot(key, shape):
    fan_in, fan_out = shape
    limit = jnp.sqrt(6.0 / (fan_in + fan_out))
    return jax.random.uniform(key, shape, jnp.float32, -limit, limit)


def reference_forward(a_hat, x, w1, b1, w2, b2):
    h = jnp.tanh(a_hat @ (x @ w1) + b1)          # eval mode: dropout = identity
    return a_hat @ (h @ w2) + b2


# --------------------------------- main ------------------------------------ #
if __name__ == "__main__":
    # Keep reference and kernel matmuls at the same (full f32) precision.
    jax.config.update("jax_default_matmul_precision", "highest")

    # TODO(synk): Planetoid dataset loading / interactive dataset selection is
    # host-side I/O with no Pallas equivalent; a small synthetic graph is used.
    N, F_IN, HIDDEN, N_CLASSES, E = 200, 16, 32, 4, 64
    TM, TK = 128, 128   # small tiles for the tiny test graph: N_p=256 -> 2x2
                        # grid, and the two disconnected communities below make
                        # the off-diagonal blocks zero (exercises the DMA skip).

    key = jax.random.PRNGKey(0)
    k_x, k_e1, k_e2, k_w1, k_w2, k_drop = jax.random.split(key, 6)

    x = jax.random.normal(k_x, (N, F_IN), jnp.float32)
    e1 = jax.random.randint(k_e1, (2, E // 2), 0, 100, jnp.int32)
    e2 = jax.random.randint(k_e2, (2, E // 2), 150, N, jnp.int32)
    edge_index = jnp.concatenate([e1, e2], axis=1)

    # GCNConv-style init: glorot weights, zero bias
    w1 = glorot(k_w1, (F_IN, HIDDEN))
    b1 = jnp.zeros((HIDDEN,), jnp.float32)
    w2 = glorot(k_w2, (HIDDEN, N_CLASSES))
    b2 = jnp.zeros((N_CLASSES,), jnp.float32)

    a_hat = build_normalized_adjacency(edge_index, N)
    ref = reference_forward(a_hat, x, w1, b1, w2, b2)

    # f32 compute path: strict correctness check vs reference
    graph_f32 = prepare_adjacency(a_hat, tm=TM, tk=TK, compute_dtype=jnp.float32)
    out_f32 = jax.block_until_ready(
        gcn_forward(graph_f32, x, w1, b1, w2, b2, training=False,
                    compute_dtype=jnp.float32, tm=TM, tk=TK))
    assert out_f32.shape == (N, N_CLASSES)
    assert jnp.allclose(out_f32, ref, atol=1e-3, rtol=1e-3), "f32 mismatch vs reference"

    # bf16 MXU path (recommended perf config): looser tolerance
    graph_bf16 = prepare_adjacency(a_hat, tm=TM, tk=TK, compute_dtype=jnp.bfloat16)
    out_bf16 = jax.block_until_ready(
        gcn_forward(graph_bf16, x, w1, b1, w2, b2, training=False,
                    compute_dtype=jnp.bfloat16, tm=TM, tk=TK))
    assert out_bf16.shape == (N, N_CLASSES)
    assert jnp.allclose(out_bf16, ref, atol=1e-1, rtol=1e-1), "bf16 mismatch vs reference"

    # training path (dropout mask streamed in) runs and produces finite values
    out_train = jax.block_until_ready(
        gcn_forward(graph_bf16, x, w1, b1, w2, b2, training=True,
                    dropout_key=k_drop, compute_dtype=jnp.bfloat16,
                    tm=TM, tk=TK))
    assert out_train.shape == (N, N_CLASSES)
    assert bool(jnp.all(jnp.isfinite(out_train)))

    print("KERNEL_OK")
</pallas_src>

<mosaic_0001>
module attributes {stable_mosaic.version = 11 : i64} {
  func.func @_xw_kernel(%arg0: i32, %arg1: memref<128x128xf32, #tpu.memory_space<vmem>>, %arg2: memref<128x128xf32, #tpu.memory_space<vmem>>, %arg3: memref<128x128xf32, #tpu.memory_space<vmem>>) attributes {dimension_semantics = [#tpu.dimension_semantics<parallel>], iteration_bounds = array<i64: 2>, scalar_prefetch = 0 : i64, scratch_operands = 0 : i64, tpu.core_type = #tpu.core_type<tc>, window_params = [{transform_indices = @transform_0, window_bounds = array<i64: 128, 128>}, {pipeline_mode = #tpu.pipeline_mode<synchronous>, transform_indices = @transform_1, window_bounds = array<i64: 128, 128>}, {transform_indices = @transform_2, window_bounds = array<i64: 128, 128>}]} {
    %c0 = arith.constant 0 : index
    %c0_0 = arith.constant 0 : index
    %0 = vector.load %arg1[%c0, %c0_0] : memref<128x128xf32, #tpu.memory_space<vmem>>, vector<128x128xf32>
    %c0_1 = arith.constant 0 : index
    %c0_2 = arith.constant 0 : index
    %1 = vector.load %arg2[%c0_1, %c0_2] : memref<128x128xf32, #tpu.memory_space<vmem>>, vector<128x128xf32>
    %cst = arith.constant dense<0.000000e+00> : vector<128x128xf32>
    %2 = tpu.matmul %0, %1, %cst {dimension_numbers = #tpu.dot_dimension_numbers<[1], [0], [0], [1], [0, 0, 1, 1], [], []>, precision = #tpu.contract_precision<fp32>} : vector<128x128xf32>, vector<128x128xf32>, vector<128x128xf32> -> vector<128x128xf32>
    %c0_3 = arith.constant 0 : index
    %c0_4 = arith.constant 0 : index
    %3 = vector.load %arg3[%c0_3, %c0_4] : memref<128x128xf32, #tpu.memory_space<vmem>>, vector<128x128xf32>
    tpu.vector_store %arg3[%c0_3, %c0_4], %2 {strides = array<i32>} : memref<128x128xf32, #tpu.memory_space<vmem>>, vector<128x128xf32>,
    return
  }
  func.func @transform_0(%arg0: i32) -> (i32, i32) {
    %c0_i32 = arith.constant 0 : i32
    %c0_i32_0 = arith.constant 0 : i32
    return %arg0, %c0_i32 : i32, i32
  }
  func.func @transform_1(%arg0: i32) -> (i32, i32) {
    %c0_i32 = arith.constant 0 : i32
    %c0_i32_0 = arith.constant 0 : i32
    %c0_i32_1 = arith.constant 0 : i32
    return %c0_i32, %c0_i32_0 : i32, i32
  }
  func.func @transform_2(%arg0: i32) -> (i32, i32) {
    %c0_i32 = arith.constant 0 : i32
    %c0_i32_0 = arith.constant 0 : i32
    return %arg0, %c0_i32 : i32, i32
  }
}

</mosaic_0001>

<llo_original>
// kernel: tpu_custom_call.1
$region0: #{tpu_custom_call.1}
  #allocation0 [shape = 'u32[]', space=smem, size = 0x4, offset = 0x4, fixed_abs, tag = 'smem constant byte address 0x4 - core index']
  #allocation1 [shape = 'u32[144,128]{1,0:T(1,128)}', space=vmem, size = 0x12000, scoped, tag = 'internal scratch']
  %s0 = inlined_call_operand.hbm [shape: f32[256,128], index: 0, kind: input, shape index: {}]
  %s1 = inlined_call_operand.hbm [shape: f32[128,128], index: 1, kind: input, shape index: {}]
  %s2 = inlined_call_operand.hbm [shape: f32[256,128], index: 2, kind: output, shape index: {}]
  %s3 = sld [smem:[#allocation0]]
  $region49: #{tpu_custom_call.1} parent=0
    _
  %s5 = ssub.s32 1, %s3
  %s6 = scalar_select 0, %s5, %s3
  $region1: #{tpu_custom_call.1} parent=0
    #allocation2 [shape = 'u8[131072]{0}', space=vmem, size = 0x20000, scoped, tag = 'input window, operand 0']
    #allocation3 [shape = 's32[2]{0}', space=sflag, size = 0x8, scoped, tag = 'scoped memory for tpu_custom_call.1']
    #allocation4 [shape = 's32[2]{0}', space=sflag, size = 0x8, scoped, tag = 'scoped memory for tpu_custom_call.1']
    #allocation5 [shape = 'u8[65536]{0}', space=vmem, size = 0x10000, scoped, tag = 'input window, operand 1, single buffered']
    #allocation6 [shape = 's32[1]{0}', space=sflag, size = 0x4, scoped, tag = 'scoped memory for tpu_custom_call.1']
    #allocation7 [shape = 'u8[131072]{0}', space=vmem, size = 0x20000, scoped, tag = 'output window, operand 0']
    %7 = vsyncpa [#allocation3], 0
    %s8 = scalar_lea.sflag [#allocation3], 1
    %9 = vsyncpa %s8, 0
    %10 = vsyncpa [#allocation6], 0
    %11 = vsyncpa [#allocation4], 0
    %s12 = scalar_lea.sflag [#allocation4], 1
    %13 = vsyncpa %s12, 0
    loop: start=0, step=1, limit=4
    $region2: #{tpu_custom_call.1} parent=1 // loop_pre_header
      _
    $region3: #{tpu_custom_call.1} parent=1 // loop_header
      %s15 = sphi 0, %s19
      %p16 = scmp.ge.s32.totalorder %s15, 4
      %s25 = sphi 0, %s27
      %s28 = sphi 0, %s25
      %s29 = sphi 0, %s28
      %s45 = sphi 0, %s29
      %s49 = sphi 0, %s49
      %s51 = sphi 0, %s49
      %s52 = sphi 0, %s51
      %s66 = sphi 0, %s52
      %s72 = sphi 0, %s74
      %s75 = sphi 0, %s72
      %s76 = sphi 0, %s75
      %s92 = sphi 0, %s76
    $region4: #{tpu_custom_call.1} parent=1 // loop_header_branch
      %18 = sbr.rel (%p16) target = $region8
    $region5: #{tpu_custom_call.1} parent=1 // loop_body
      %s20 = ssub.s32 %s15, 1
      %s21 = ssub.s32 %s15, 2
      %s22 = sadd.s32 %s15, 1
      %s23 = ssub.s32 %s15, %s22
      %p24 = scmp.eq.s32.totalorder %s23, 0
      %s26 = sadd.s32 %s25, 1
      %s27 = scalar_select %p24, %s25, %s26
      %p30 = pneg %p24
      %p31 = scmp.eq.s32.totalorder %s15, 1
      %p32 = por %p30, %p31
      %p33 = scmp.ne.s32.totalorder %s25, %s28
      %p34 = scmp.eq.s32.totalorder %s15, 0
      %p35 = por %p33, %p34
      %p36 = scmp.ne.s32.totalorder %s25, %s28
      %p37 = scmp.eq.s32.totalorder %s20, 1
      %p38 = por %p36, %p37
      %p39 = scmp.ne.s32.totalorder %s28, %s29
      %p40 = scmp.eq.s32.totalorder %s20, 0
      %p41 = por %p39, %p40
      %p42 = scmp.ne.s32.totalorder %s28, %s29
      %p43 = scmp.eq.s32.totalorder %s21, 1
      %p44 = por %p42, %p43
      %p46 = scmp.ne.s32.totalorder %s29, %s45
      %p47 = scmp.eq.s32.totalorder %s21, 0
      %p48 = por %p46, %p47
      %s50 = sadd.s32 %s49, 1
      %p53 = scmp.eq.s32.totalorder %s15, 1
      %p54 = scmp.ne.s32.totalorder %s49, %s51
      %p55 = scmp.eq.s32.totalorder %s15, 0
      %p56 = por %p54, %p55
      %p57 = scmp.ne.s32.totalorder %s49, %s51
      %p58 = scmp.eq.s32.totalorder %s20, 1
      %p59 = por %p57, %p58
      %p60 = scmp.ne.s32.totalorder %s51, %s52
      %p61 = scmp.eq.s32.totalorder %s20, 0
      %p62 = por %p60, %p61
      %p63 = scmp.ne.s32.totalorder %s51, %s52
      %p64 = scmp.eq.s32.totalorder %s21, 1
      %p65 = por %p63, %p64
      %p67 = scmp.ne.s32.totalorder %s52, %s66
      %p68 = scmp.eq.s32.totalorder %s21, 0
      %p69 = por %p67, %p68
      %s70 = ssub.s32 %s15, %s22
      %p71 = scmp.eq.s32.totalorder %s70, 0
      %s73 = sadd.s32 %s72, 1
      %s74 = scalar_select %p71, %s72, %s73
      %p77 = pneg %p71
      %p78 = scmp.eq.s32.totalorder %s15, 1
      %p79 = por %p77, %p78
      %p80 = scmp.ne.s32.totalorder %s72, %s75
      %p81 = scmp.eq.s32.totalorder %s15, 0
      %p82 = por %p80, %p81
      %p83 = scmp.ne.s32.totalorder %s72, %s75
      %p84 = scmp.eq.s32.totalorder %s20, 1
      %p85 = por %p83, %p84
      %p86 = scmp.ne.s32.totalorder %s75, %s76
      %p87 = scmp.eq.s32.totalorder %s20, 0
      %p88 = por %p86, %p87
      %p89 = scmp.ne.s32.totalorder %s75, %s76
      %p90 = scmp.eq.s32.totalorder %s21, 1
      %p91 = por %p89, %p90
      %p93 = scmp.ne.s32.totalorder %s76, %s92
      %p94 = scmp.eq.s32.totalorder %s21, 0
      %p95 = por %p93, %p94
      %p96 = scmp.le.s32.totalorder 1, %s15
      %p97 = scmp.lt.s32.totalorder %s15, 3
      %p98 = pnand %p96, %p97
      %p99 = pneg %p98
      // Predicated region
      $region9: #{tpu_custom_call.1} parent=5 // pred_check
        _
      $region10: #{tpu_custom_call.1} parent=5 // pred_check_branch
        %101 = sbr.rel (%p98) target = $region12
      $region11: #{tpu_custom_call.1} parent=5 // pred_region
        %s102 = ssub.s32 %s15, 1
        // Predicated region
        $region13: #{tpu_custom_call.1} parent=11 // pred_check
          %p103 = pneg %p62
        $region14: #{tpu_custom_call.1} parent=11 // pred_check_branch
          %105 = sbr.rel (%p103) target = $region16
        $region15: #{tpu_custom_call.1} parent=11 // pred_region
          %s107 = ssub.s32 2048, 2048
          %108 = vsyncadd [#allocation6], %s107
          %s109 = sshll.u32 [#allocation5], 4
          %s110 = int_to_ptr.vmem [resolvable:$true] %s109
          %115 = dma.hbm_to_vmem [thread:$0]  %s1, 2048, %s110, [#allocation6], 128, 128, 8
        $region16: #{tpu_custom_call.1} parent=11 // pred_fallthru
          _
      $region12: #{tpu_custom_call.1} parent=5 // pred_fallthru
        _
      %p116 = scmp.lt.s32.totalorder %s15, 2
      // Predicated region
      $region17: #{tpu_custom_call.1} parent=5 // pred_check
        %p117 = pneg %p116
      $region18: #{tpu_custom_call.1} parent=5 // pred_check_branch
        %119 = sbr.rel (%p117) target = $region20
      $region19: #{tpu_custom_call.1} parent=5 // pred_region
        // Predicated region
        $region21: #{tpu_custom_call.1} parent=19 // pred_check
          %p120 = pneg %p35
        $region22: #{tpu_custom_call.1} parent=19 // pred_check_branch
          %122 = sbr.rel (%p120) target = $region24
        $region23: #{tpu_custom_call.1} parent=19 // pred_region
          %s123 = sand.u32 %s25, 1
          %s124 = scalar_lea.sflag [#allocation3], %s123
          %s125 = sand.u32 %s25, 1
          %s126 = smul.addr %s125, 128
          %s127 = scalar_lea.vmem [#allocation2], %s126
          %s128 = smul.u32 16, %s15
          %s130 = ssub.s32 2048, 2048
          %131 = vsyncadd %s124, %s130
          %s132 = smul.addr %s128, 128
          %s133 = scalar_lea.hbm %s0, %s132
          %s134 = sshll.u32 %s127, 4
          %s135 = int_to_ptr.vmem [resolvable:$true] %s134
          %140 = dma.hbm_to_vmem [thread:$0]  %s133, 2048, %s135, %s124, 128, 128, 8
        $region24: #{tpu_custom_call.1} parent=19 // pred_fallthru
          _
      $region20: #{tpu_custom_call.1} parent=5 // pred_fallthru
        _
      %p141 = scmp.le.s32.totalorder 1, %s15
      %p142 = scmp.lt.s32.totalorder %s15, 3
      %p143 = pnand %p141, %p142
      %p144 = pneg %p143
      // Predicated region
      $region25: #{tpu_custom_call.1} parent=5 // pred_check
        _
      $region26: #{tpu_custom_call.1} parent=5 // pred_check_branch
        %146 = sbr.rel (%p143) target = $region28
      $region27: #{tpu_custom_call.1} parent=5 // pred_region
        %s147 = ssub.s32 %s15, 1
        %s148 = sand.u32 %s28, 1
        %s149 = scalar_lea.sflag [#allocation3], %s148
        %s150 = sand.u32 %s28, 1
        %s151 = smul.addr %s150, 128
        %s152 = scalar_lea.vmem [#allocation2], %s151
        // Predicated region
        $region29: #{tpu_custom_call.1} parent=27 // pred_check
          %p153 = pneg %p41
        $region30: #{tpu_custom_call.1} parent=27 // pred_check_branch
          %155 = sbr.rel (%p153) target = $region32
        $region31: #{tpu_custom_call.1} parent=27 // pred_region
          %156 = dma.done %s149, 2048
        $region32: #{tpu_custom_call.1} parent=27 // pred_fallthru
          _
        // Predicated region
        $region33: #{tpu_custom_call.1} parent=27 // pred_check
          %p157 = pneg %p62
        $region34: #{tpu_custom_call.1} parent=27 // pred_check_branch
          %159 = sbr.rel (%p157) target = $region36
        $region35: #{tpu_custom_call.1} parent=27 // pred_region
          %160 = dma.done [#allocation6], 2048
        $region36: #{tpu_custom_call.1} parent=27 // pred_fallthru
          _
        %s161 = sand.u32 %s28, 1
        %s162 = scalar_lea.sflag [#allocation3], %s161
        %s163 = sand.u32 %s28, 1
        %s164 = smul.addr %s163, 128
        %s165 = scalar_lea.vmem [#allocation2], %s164
        %p166 = pneg %p41
        %p167 = pneg %p38
        %p168 = pneg %p62
        %p169 = pneg %p59
        %p170 = pneg %p88
        %p171 = pneg %p85
        %s172 = sand.u32 %s75, 1
        %s173 = scalar_lea.sflag [#allocation4], %s172
        %s174 = sand.u32 %s75, 1
        %s175 = smul.addr %s174, 128
        %s176 = scalar_lea.vmem [#allocation7], %s175
        %s177 = smul.u32 16, %s20
        %s178 = smul.u32 16, %s20
        %v179 = vld [vmem:[%s152] sm:$0xff]
        %v180 = vld [vmem:[%s152 + $0x8] sm:$0xff]
        %v181 = vld [vmem:[%s152 + $0x10] sm:$0xff]
        %v182 = vld [vmem:[%s152 + $0x18] sm:$0xff]
        %v183 = vld [vmem:[%s152 + $0x20] sm:$0xff]
        %v184 = vld [vmem:[%s152 + $0x28] sm:$0xff]
        %v185 = vld [vmem:[%s152 + $0x30] sm:$0xff]
        %v186 = vld [vmem:[%s152 + $0x38] sm:$0xff]
        %v187 = vld [vmem:[%s152 + $0x40] sm:$0xff]
        %v188 = vld [vmem:[%s152 + $0x48] sm:$0xff]
        %v189 = vld [vmem:[%s152 + $0x50] sm:$0xff]
        %v190 = vld [vmem:[%s152 + $0x58] sm:$0xff]
        %v191 = vld [vmem:[%s152 + $0x60] sm:$0xff]
        %v192 = vld [vmem:[%s152 + $0x68] sm:$0xff]
        %v193 = vld [vmem:[%s152 + $0x70] sm:$0xff]
        %v194 = vld [vmem:[%s152 + $0x78] sm:$0xff]
        %v195 = vld [vmem:[#allocation5] sm:$0xff]
        %v196 = vld [vmem:[#allocation5 + $0x8] sm:$0xff]
        %v197 = vld [vmem:[#allocation5 + $0x10] sm:$0xff]
        %v198 = vld [vmem:[#allocation5 + $0x18] sm:$0xff]
        %v199 = vld [vmem:[#allocation5 + $0x20] sm:$0xff]
        %v200 = vld [vmem:[#allocation5 + $0x28] sm:$0xff]
        %v201 = vld [vmem:[#allocation5 + $0x30] sm:$0xff]
        %v202 = vld [vmem:[#allocation5 + $0x38] sm:$0xff]
        %v203 = vld [vmem:[#allocation5 + $0x40] sm:$0xff]
        %v204 = vld [vmem:[#allocation5 + $0x48] sm:$0xff]
        %v205 = vld [vmem:[#allocation5 + $0x50] sm:$0xff]
        %v206 = vld [vmem:[#allocation5 + $0x58] sm:$0xff]
        %v207 = vld [vmem:[#allocation5 + $0x60] sm:$0xff]
        %v208 = vld [vmem:[#allocation5 + $0x68] sm:$0xff]
        %v209 = vld [vmem:[#allocation5 + $0x70] sm:$0xff]
        %v210 = vld [vmem:[#allocation5 + $0x78] sm:$0xff]
        %211 = vmatprep.subr.mxu0 0.0
        %v212 = vand.u32 %v195, 4294901760
        %213 = vmatpush1.msra.mxu0 %v212
        %214 = vmatprep.subr.mxu0 0.0
        %v215 = vand.u32 %v196, 4294901760
        %216 = vmatpush1.msra.mxu0 %v215
        %217 = vmatprep.subr.mxu0 0.0
        %v218 = vand.u32 %v197, 4294901760
        %219 = vmatpush1.msra.mxu0 %v218
        %220 = vmatprep.subr.mxu0 0.0
        %v221 = vand.u32 %v198, 4294901760
        %222 = vmatpush1.msra.mxu0 %v221
        %223 = vmatprep.subr.mxu0 0.0
        %v224 = vand.u32 %v199, 4294901760
        %225 = vmatpush1.msra.mxu0 %v224
        %226 = vmatprep.subr.mxu0 0.0
        %v227 = vand.u32 %v200, 4294901760
        %228 = vmatpush1.msra.mxu0 %v227
        %229 = vmatprep.subr.mxu0 0.0
        %v230 = vand.u32 %v201, 4294901760
        %231 = vmatpush1.msra.mxu0 %v230
        %232 = vmatprep.subr.mxu0 0.0
        %v233 = vand.u32 %v202, 4294901760
        %234 = vmatpush1.msra.mxu0 %v233
        %235 = vmatprep.subr.mxu0 0.0
        %v236 = vand.u32 %v203, 4294901760
        %237 = vmatpush1.msra.mxu0 %v236
        %238 = vmatprep.subr.mxu0 0.0
        %v239 = vand.u32 %v204, 4294901760
        %240 = vmatpush1.msra.mxu0 %v239
        %241 = vmatprep.subr.mxu0 0.0
        %v242 = vand.u32 %v205, 4294901760
        %243 = vmatpush1.msra.mxu0 %v242
        %244 = vmatprep.subr.mxu0 0.0
        %v245 = vand.u32 %v206, 4294901760
        %246 = vmatpush1.msra.mxu0 %v245
        %247 = vmatprep.subr.mxu0 0.0
        %v248 = vand.u32 %v207, 4294901760
        %249 = vmatpush1.msra.mxu0 %v248
        %250 = vmatprep.subr.mxu0 0.0
        %v251 = vand.u32 %v208, 4294901760
        %252 = vmatpush1.msra.mxu0 %v251
        %253 = vmatprep.subr.mxu0 0.0
        %v254 = vand.u32 %v209, 4294901760
        %255 = vmatpush1.msra.mxu0 %v254
        %256 = vmatprep.subr.mxu0 0.0
        %v257 = vand.u32 %v210, 4294901760
        %258 = vmatpush1.msra.mxu0 %v257
        %259 = vmatprep.subr.mxu0 0.0
        %260 = vmatpush1.msra.mxu0 0.0
        %261 = vmatprep.subr.mxu0 0.0
        %262 = vmatpush1.msra.mxu0 0.0
        %263 = vmatprep.subr.mxu0 0.0
        %264 = vmatpush1.msra.mxu0 0.0
        %265 = vmatprep.subr.mxu0 0.0
        %266 = vmatpush1.msra.mxu0 0.0
        %267 = vmatprep.subr.mxu0 0.0
        %268 = vmatpush1.msra.mxu0 0.0
        %269 = vmatprep.subr.mxu0 0.0
        %270 = vmatpush1.msra.mxu0 0.0
        %271 = vmatprep.subr.mxu0 0.0
        %272 = vmatpush1.msra.mxu0 0.0
        %273 = vmatprep.subr.mxu0 0.0
        %274 = vmatpush1.msra.mxu0 0.0
        %275 = vmatprep.subr.mxu0 0.0
        %276 = vmatpush1.msra.mxu0 0.0
        %277 = vmatprep.subr.mxu0 0.0
        %278 = vmatpush1.msra.mxu0 0.0
        %279 = vmatprep.subr.mxu0 0.0
        %280 = vmatpush1.msra.mxu0 0.0
        %281 = vmatprep.subr.mxu0 0.0
        %282 = vmatpush1.msra.mxu0 0.0
        %283 = vmatprep.subr.mxu0 0.0
        %284 = vmatpush1.msra.mxu0 0.0
        %285 = vmatprep.subr.mxu0 0.0
        %286 = vmatpush1.msra.mxu0 0.0
        %287 = vmatprep.subr.mxu0 0.0
        %288 = vmatpush1.msra.mxu0 0.0
        %289 = vmatprep.subr.mxu0 0.0
        %290 = vmatpush1.msra.mxu0 0.0
        %291 = vmatprep.mubr.f32.mxu0 0.0
        %v292 = vand.u32 %v179, 4294901760
        %v293 = vsub.f32 %v179, %v292
        %v294 = vand.u32 %v293, 4294901760
        %v295 = vsub.f32 %v293, %v294
        %v296 = vand.u32 %v295, 4294901760
        %297 = vmatmul.mubr.f32.gmra.mrb[0].mxu0 %v296
        %v298 = vpop.f32.mrb[0].mxu0
        %v299 = vadd.f32 0.0, %v298
        %v300 = vpop.f32.mrb[0].mxu0
        %301 = vmatprep.mubr.f32.mxu0 0.0
        %v302 = vand.u32 %v180, 4294901760
        %v303 = vsub.f32 %v180, %v302
        %v304 = vand.u32 %v303, 4294901760
        %v305 = vsub.f32 %v303, %v304
        %v306 = vand.u32 %v305, 4294901760
        %307 = vmatmul.mubr.f32.gmra.mrb[0].mxu0 %v306
        %v308 = vpop.f32.mrb[0].mxu0
        %v309 = vadd.f32 0.0, %v308
        %v310 = vpop.f32.mrb[0].mxu0
        %311 = vmatprep.mubr.f32.mxu0 0.0
        %v312 = vand.u32 %v181, 4294901760
        %v313 = vsub.f32 %v181, %v312
        %v314 = vand.u32 %v313, 4294901760
        %v315 = vsub.f32 %v313, %v314
        %v316 = vand.u32 %v315, 4294901760
        %317 = vmatmul.mubr.f32.gmra.mrb[0].mxu0 %v316
        %v318 = vpop.f32.mrb[0].mxu0
        %v319 = vadd.f32 0.0, %v318
        %v320 = vpop.f32.mrb[0].mxu0
        %321 = vmatprep.mubr.f32.mxu0 0.0
        %v322 = vand.u32 %v182, 4294901760
        %v323 = vsub.f32 %v182, %v322
        %v324 = vand.u32 %v323, 4294901760
        %v325 = vsub.f32 %v323, %v324
        %v326 = vand.u32 %v325, 4294901760
        %327 = vmatmul.mubr.f32.gmra.mrb[0].mxu0 %v326
        %v328 = vpop.f32.mrb[0].mxu0
        %v329 = vadd.f32 0.0, %v328
        %v330 = vpop.f32.mrb[0].mxu0
        %331 = vmatprep.mubr.f32.mxu0 0.0
        %v332 = vand.u32 %v183, 4294901760
        %v333 = vsub.f32 %v183, %v332
        %v334 = vand.u32 %v333, 4294901760
        %v335 = vsub.f32 %v333, %v334
        %v336 = vand.u32 %v335, 4294901760
        %337 = vmatmul.mubr.f32.gmra.mrb[0].mxu0 %v336
        %v338 = vpop.f32.mrb[0].mxu0
        %v339 = vadd.f32 0.0, %v338
        %v340 = vpop.f32.mrb[0].mxu0
        %341 = vmatprep.mubr.f32.mxu0 0.0
        %v342 = vand.u32 %v184, 4294901760
        %v343 = vsub.f32 %v184, %v342
        %v344 = vand.u32 %v343, 4294901760
        %v345 = vsub.f32 %v343, %v344
        %v346 = vand.u32 %v345, 4294901760
        %347 = vmatmul.mubr.f32.gmra.mrb[0].mxu0 %v346
        %v348 = vpop.f32.mrb[0].mxu0
        %v349 = vadd.f32 0.0, %v348
        %v350 = vpop.f32.mrb[0].mxu0
        %351 = vmatprep.mubr.f32.mxu0 0.0
        %v352 = vand.u32 %v185, 4294901760
        %v353 = vsub.f32 %v185, %v352
        %v354 = vand.u32 %v353, 4294901760
        %v355 = vsub.f32 %v353, %v354
        %v356 = vand.u32 %v355, 4294901760
        %357 = vmatmul.mubr.f32.gmra.mrb[0].mxu0 %v356
        %v358 = vpop.f32.mrb[0].mxu0
        %v359 = vadd.f32 0.0, %v358
        %v360 = vpop.f32.mrb[0].mxu0
        %361 = vmatprep.mubr.f32.mxu0 0.0
        %v362 = vand.u32 %v186, 4294901760
        %v363 = vsub.f32 %v186, %v362
        %v364 = vand.u32 %v363, 4294901760
        %v365 = vsub.f32 %v363, %v364
        %v366 = vand.u32 %v365, 4294901760
        %367 = vmatmul.mubr.f32.gmra.mrb[0].mxu0 %v366
        %v368 = vpop.f32.mrb[0].mxu0
        %v369 = vadd.f32 0.0, %v368
        %v370 = vpop.f32.mrb[0].mxu0
        %371 = vmatprep.mubr.f32.mxu0 0.0
        %v372 = vand.u32 %v187, 4294901760
        %v373 = vsub.f32 %v187, %v372
        %v374 = vand.u32 %v373, 4294901760
        %v375 = vsub.f32 %v373, %v374
        %v376 = vand.u32 %v375, 4294901760
        %377 = vmatmul.mubr.f32.gmra.mrb[0].mxu0 %v376
        %v378 = vpop.f32.mrb[0].mxu0
        %v379 = vadd.f32 0.0, %v378
        %v380 = vpop.f32.mrb[0].mxu0
        %381 = vmatprep.mubr.f32.mxu0 0.0
        %v382 = vand.u32 %v188, 4294901760
        %v383 = vsub.f32 %v188, %v382
        %v384 = vand.u32 %v383, 4294901760
        %v385 = vsub.f32 %v383, %v384
        %v386 = vand.u32 %v385, 4294901760
        %387 = vmatmul.mubr.f32.gmra.mrb[0].mxu0 %v386
        %v388 = vpop.f32.mrb[0].mxu0
        %v389 = vadd.f32 0.0, %v388
        %v390 = vpop.f32.mrb[0].mxu0
        %391 = vmatprep.mubr.f32.mxu0 0.0
        %v392 = vand.u32 %v189, 4294901760
        %v393 = vsub.f32 %v189, %v392
        %v394 = vand.u32 %v393, 4294901760
        %v395 = vsub.f32 %v393, %v394
        %v396 = vand.u32 %v395, 4294901760
        %397 = vmatmul.mubr.f32.gmra.mrb[0].mxu0 %v396
        %v398 = vpop.f32.mrb[0].mxu0
        %v399 = vadd.f32 0.0, %v398
        %v400 = vpop.f32.mrb[0].mxu0
        %401 = vmatprep.mubr.f32.mxu0 0.0
        %v402 = vand.u32 %v190, 4294901760
        %v403 = vsub.f32 %v190, %v402
        %v404 = vand.u32 %v403, 4294901760
        %v405 = vsub.f32 %v403, %v404
        %v406 = vand.u32 %v405, 4294901760
        %407 = vmatmul.mubr.f32.gmra.mrb[0].mxu0 %v406
        %v408 = vpop.f32.mrb[0].mxu0
        %v409 = vadd.f32 0.0, %v408
        %v410 = vpop.f32.mrb[0].mxu0
        %411 = vmatprep.mubr.f32.mxu0 0.0
        %v412 = vand.u32 %v191, 4294901760
        %v413 = vsub.f32 %v191, %v412
        %v414 = vand.u32 %v413, 4294901760
        %v415 = vsub.f32 %v413, %v414
        %v416 = vand.u32 %v415, 4294901760
        %417 = vmatmul.mubr.f32.gmra.mrb[0].mxu0 %v416
        %v418 = vpop.f32.mrb[0].mxu0
        %v419 = vadd.f32 0.0, %v418
        %v420 = vpop.f32.mrb[0].mxu0
        %421 = vmatprep.mubr.f32.mxu0 0.0
        %v422 = vand.u32 %v192, 4294901760
        %v423 = vsub.f32 %v192, %v422
        %v424 = vand.u32 %v423, 4294901760
        %v425 = vsub.f32 %v423, %v424
        %v426 = vand.u32 %v425, 4294901760
        %427 = vmatmul.mubr.f32.gmra.mrb[0].mxu0 %v426
        %v428 = vpop.f32.mrb[0].mxu0
        %v429 = vadd.f32 0.0, %v428
        %v430 = vpop.f32.mrb[0].mxu0
        %431 = vmatprep.mubr.f32.mxu0 0.0
        %v432 = vand.u32 %v193, 4294901760
        %v433 = vsub.f32 %v193, %v432
        %v434 = vand.u32 %v433, 4294901760
        %v435 = vsub.f32 %v433, %v434
        %v436 = vand.u32 %v435, 4294901760
        %437 = vmatmul.mubr.f32.gmra.mrb[0].mxu0 %v436
        %v438 = vpop.f32.mrb[0].mxu0
        %v439 = vadd.f32 0.0, %v438
        %v440 = vpop.f32.mrb[0].mxu0
        %441 = vmatprep.mubr.f32.mxu0 0.0
        %v442 = vand.u32 %v194, 4294901760
        %v443 = vsub.f32 %v194, %v442
        %v444 = vand.u32 %v443, 4294901760
        %v445 = vsub.f32 %v443, %v444
        %v446 = vand.u32 %v445, 4294901760
        %447 = vmatmul.mubr.f32.gmra.mrb[0].mxu0 %v446
        %v448 = vpop.f32.mrb[0].mxu0
        %v449 = vadd.f32 0.0, %v448
        %v450 = vpop.f32.mrb[0].mxu0
        %451 = vdwg.mxu0
        %452 = vmatprep.subr.mxu0 0.0
        %v453 = vand.u32 %v195, 4294901760
        %v454 = vsub.f32 %v195, %v453
        %v455 = vand.u32 %v454, 4294901760
        %v456 = vsub.f32 %v454, %v455
        %v457 = vand.u32 %v456, 4294901760
        %458 = vmatpush1.msra.mxu0 %v457
        %459 = vmatprep.subr.mxu0 0.0
        %v460 = vand.u32 %v196, 4294901760
        %v461 = vsub.f32 %v196, %v460
        %v462 = vand.u32 %v461, 4294901760
        %v463 = vsub.f32 %v461, %v462
        %v464 = vand.u32 %v463, 4294901760
        %465 = vmatpush1.msra.mxu0 %v464
        %466 = vmatprep.subr.mxu0 0.0
        %v467 = vand.u32 %v197, 4294901760
        %v468 = vsub.f32 %v197, %v467
        %v469 = vand.u32 %v468, 4294901760
        %v470 = vsub.f32 %v468, %v469
        %v471 = vand.u32 %v470, 4294901760
        %472 = vmatpush1.msra.mxu0 %v471
        %473 = vmatprep.subr.mxu0 0.0
        %v474 = vand.u32 %v198, 4294901760
        %v475 = vsub.f32 %v198, %v474
        %v476 = vand.u32 %v475, 4294901760
        %v477 = vsub.f32 %v475, %v476
        %v478 = vand.u32 %v477, 4294901760
        %479 = vmatpush1.msra.mxu0 %v478
        %480 = vmatprep.subr.mxu0 0.0
        %v481 = vand.u32 %v199, 4294901760
        %v482 = vsub.f32 %v199, %v481
        %v483 = vand.u32 %v482, 4294901760
        %v484 = vsub.f32 %v482, %v483
        %v485 = vand.u32 %v484, 4294901760
        %486 = vmatpush1.msra.mxu0 %v485
        %487 = vmatprep.subr.mxu0 0.0
        %v488 = vand.u32 %v200, 4294901760
        %v489 = vsub.f32 %v200, %v488
        %v490 = vand.u32 %v489, 4294901760
        %v491 = vsub.f32 %v489, %v490
        %v492 = vand.u32 %v491, 4294901760
        %493 = vmatpush1.msra.mxu0 %v492
        %494 = vmatprep.subr.mxu0 0.0
        %v495 = vand.u32 %v201, 4294901760
        %v496 = vsub.f32 %v201, %v495
        %v497 = vand.u32 %v496, 4294901760
        %v498 = vsub.f32 %v496, %v497
        %v499 = vand.u32 %v498, 4294901760
        %500 = vmatpush1.msra.mxu0 %v499
        %501 = vmatprep.subr.mxu0 0.0
        %v502 = vand.u32 %v202, 4294901760
        %v503 = vsub.f32 %v202, %v502
        %v504 = vand.u32 %v503, 4294901760
        %v505 = vsub.f32 %v503, %v504
        %v506 = vand.u32 %v505, 4294901760
        %507 = vmatpush1.msra.mxu0 %v506
        %508 = vmatprep.subr.mxu0 0.0
        %v509 = vand.u32 %v203, 4294901760
        %v510 = vsub.f32 %v203, %v509
        %v511 = vand.u32 %v510, 4294901760
        %v512 = vsub.f32 %v510, %v511
        %v513 = vand.u32 %v512, 4294901760
        %514 = vmatpush1.msra.mxu0 %v513
        %515 = vmatprep.subr.mxu0 0.0
        %v516 = vand.u32 %v204, 4294901760
        %v517 = vsub.f32 %v204, %v516
        %v518 = vand.u32 %v517, 4294901760
        %v519 = vsub.f32 %v517, %v518
        %v520 = vand.u32 %v519, 4294901760
        %521 = vmatpush1.msra.mxu0 %v520
        %522 = vmatprep.subr.mxu0 0.0
        %v523 = vand.u32 %v205, 4294901760
        %v524 = vsub.f32 %v205, %v523
        %v525 = vand.u32 %v524, 4294901760
        %v526 = vsub.f32 %v524, %v525
        %v527 = vand.u32 %v526, 4294901760
        %528 = vmatpush1.msra.mxu0 %v527
        %529 = vmatprep.subr.mxu0 0.0
        %v530 = vand.u32 %v206, 4294901760
        %v531 = vsub.f32 %v206, %v530
        %v532 = vand.u32 %v531, 4294901760
        %v533 = vsub.f32 %v531, %v532
        %v534 = vand.u32 %v533, 4294901760
        %535 = vmatpush1.msra.mxu0 %v534
        %536 = vmatprep.subr.mxu0 0.0
        %v537 = vand.u32 %v207, 4294901760
        %v538 = vsub.f32 %v207, %v537
        %v539 = vand.u32 %v538, 4294901760
        %v540 = vsub.f32 %v538, %v539
        %v541 = vand.u32 %v540, 4294901760
        %542 = vmatpush1.msra.mxu0 %v541
        %543 = vmatprep.subr.mxu0 0.0
        %v544 = vand.u32 %v208, 4294901760
        %v545 = vsub.f32 %v208, %v544
        %v546 = vand.u32 %v545, 4294901760
        %v547 = vsub.f32 %v545, %v546
        %v548 = vand.u32 %v547, 4294901760
        %549 = vmatpush1.msra.mxu0 %v548
        %550 = vmatprep.subr.mxu0 0.0
        %v551 = vand.u32 %v209, 4294901760
        %v552 = vsub.f32 %v209, %v551
        %v553 = vand.u32 %v552, 4294901760
        %v554 = vsub.f32 %v552, %v553
        %v555 = vand.u32 %v554, 4294901760
        %556 = vmatpush1.msra.mxu0 %v555
        %557 = vmatprep.subr.mxu0 0.0
        %v558 = vand.u32 %v210, 4294901760
        %v559 = vsub.f32 %v210, %v558
        %v560 = vand.u32 %v559, 4294901760
        %v561 = vsub.f32 %v559, %v560
        %v562 = vand.u32 %v561, 4294901760
        %563 = vmatpush1.msra.mxu0 %v562
        %564 = vmatprep.subr.mxu0 0.0
        %565 = vmatpush1.msra.mxu0 0.0
        %566 = vmatprep.subr.mxu0 0.0
        %567 = vmatpush1.msra.mxu0 0.0
        %568 = vmatprep.subr.mxu0 0.0
        %569 = vmatpush1.msra.mxu0 0.0
        %570 = vmatprep.subr.mxu0 0.0
        %571 = vmatpush1.msra.mxu0 0.0
        %572 = vmatprep.subr.mxu0 0.0
        %573 = vmatpush1.msra.mxu0 0.0
        %574 = vmatprep.subr.mxu0 0.0
        %575 = vmatpush1.msra.mxu0 0.0
        %576 = vmatprep.subr.mxu0 0.0
        %577 = vmatpush1.msra.mxu0 0.0
        %578 = vmatprep.subr.mxu0 0.0
        %579 = vmatpush1.msra.mxu0 0.0
        %580 = vmatprep.subr.mxu0 0.0
        %581 = vmatpush1.msra.mxu0 0.0
        %582 = vmatprep.subr.mxu0 0.0
        %583 = vmatpush1.msra.mxu0 0.0
        %584 = vmatprep.subr.mxu0 0.0
        %585 = vmatpush1.msra.mxu0 0.0
        %586 = vmatprep.subr.mxu0 0.0
        %587 = vmatpush1.msra.mxu0 0.0
        %588 = vmatprep.subr.mxu0 0.0
        %589 = vmatpush1.msra.mxu0 0.0
        %590 = vmatprep.subr.mxu0 0.0
        %591 = vmatpush1.msra.mxu0 0.0
        %592 = vmatprep.subr.mxu0 0.0
        %593 = vmatpush1.msra.mxu0 0.0
        %594 = vmatprep.subr.mxu0 0.0
        %595 = vmatpush1.msra.mxu0 0.0
        %596 = vmatprep.mubr.f32.mxu0 0.0
        %v597 = vand.u32 %v179, 4294901760
        %598 = vmatmul.mubr.f32.gmra.mrb[0].mxu0 %v597
        %v599 = vpop.f32.mrb[0].mxu0
        %v600 = vadd.f32 %v299, %v599
        %v601 = vpop.f32.mrb[0].mxu0
        %602 = vmatprep.mubr.f32.mxu0 0.0
        %v603 = vand.u32 %v180, 4294901760
        %604 = vmatmul.mubr.f32.gmra.mrb[0].mxu0 %v603
        %v605 = vpop.f32.mrb[0].mxu0
        %v606 = vadd.f32 %v309, %v605
        %v607 = vpop.f32.mrb[0].mxu0
        %608 = vmatprep.mubr.f32.mxu0 0.0
        %v609 = vand.u32 %v181, 4294901760
        %610 = vmatmul.mubr.f32.gmra.mrb[0].mxu0 %v609
        %v611 = vpop.f32.mrb[0].mxu0
        %v612 = vadd.f32 %v319, %v611
        %v613 = vpop.f32.mrb[0].mxu0
        %614 = vmatprep.mubr.f32.mxu0 0.0
        %v615 = vand.u32 %v182, 4294901760
        %616 = vmatmul.mubr.f32.gmra.mrb[0].mxu0 %v615
        %v617 = vpop.f32.mrb[0].mxu0
        %v618 = vadd.f32 %v329, %v617
        %v619 = vpop.f32.mrb[0].mxu0
        %620 = vmatprep.mubr.f32.mxu0 0.0
        %v621 = vand.u32 %v183, 4294901760
        %622 = vmatmul.mubr.f32.gmra.mrb[0].mxu0 %v621
        %v623 = vpop.f32.mrb[0].mxu0
        %v624 = vadd.f32 %v339, %v623
        %v625 = vpop.f32.mrb[0].mxu0
        %626 = vmatprep.mubr.f32.mxu0 0.0
        %v627 = vand.u32 %v184, 4294901760
        %628 = vmatmul.mubr.f32.gmra.mrb[0].mxu0 %v627
        %v629 = vpop.f32.mrb[0].mxu0
        %v630 = vadd.f32 %v349, %v629
        %v631 = vpop.f32.mrb[0].mxu0
        %632 = vmatprep.mubr.f32.mxu0 0.0
        %v633 = vand.u32 %v185, 4294901760
        %634 = vmatmul.mubr.f32.gmra.mrb[0].mxu0 %v633
        %v635 = vpop.f32.mrb[0].mxu0
        %v636 = vadd.f32 %v359, %v635
        %v637 = vpop.f32.mrb[0].mxu0
        %638 = vmatprep.mubr.f32.mxu0 0.0
        %v639 = vand.u32 %v186, 4294901760
        %640 = vmatmul.mubr.f32.gmra.mrb[0].mxu0 %v639
        %v641 = vpop.f32.mrb[0].mxu0
        %v642 = vadd.f32 %v369, %v641
        %v643 = vpop.f32.mrb[0].mxu0
        %644 = vmatprep.mubr.f32.mxu0 0.0
        %v645 = vand.u32 %v187, 4294901760
        %646 = vmatmul.mubr.f32.gmra.mrb[0].mxu0 %v645
        %v647 = vpop.f32.mrb[0].mxu0
        %v648 = vadd.f32 %v379, %v647
        %v649 = vpop.f32.mrb[0].mxu0
        %650 = vmatprep.mubr.f32.mxu0 0.0
        %v651 = vand.u32 %v188, 4294901760
        %652 = vmatmul.mubr.f32.gmra.mrb[0].mxu0 %v651
        %v653 = vpop.f32.mrb[0].mxu0
        %v654 = vadd.f32 %v389, %v653
        %v655 = vpop.f32.mrb[0].mxu0
        %656 = vmatprep.mubr.f32.mxu0 0.0
        %v657 = vand.u32 %v189, 4294901760
        %658 = vmatmul.mubr.f32.gmra.mrb[0].mxu0 %v657
        %v659 = vpop.f32.mrb[0].mxu0
        %v660 = vadd.f32 %v399, %v659
        %v661 = vpop.f32.mrb[0].mxu0
        %662 = vmatprep.mubr.f32.mxu0 0.0
        %v663 = vand.u32 %v190, 4294901760
        %664 = vmatmul.mubr.f32.gmra.mrb[0].mxu0 %v663
        %v665 = vpop.f32.mrb[0].mxu0
        %v666 = vadd.f32 %v409, %v665
        %v667 = vpop.f32.mrb[0].mxu0
        %668 = vmatprep.mubr.f32.mxu0 0.0
        %v669 = vand.u32 %v191, 4294901760
        %670 = vmatmul.mubr.f32.gmra.mrb[0].mxu0 %v669
        %v671 = vpop.f32.mrb[0].mxu0
        %v672 = vadd.f32 %v419, %v671
        %v673 = vpop.f32.mrb[0].mxu0
        %674 = vmatprep.mubr.f32.mxu0 0.0
        %v675 = vand.u32 %v192, 4294901760
        %676 = vmatmul.mubr.f32.gmra.mrb[0].mxu0 %v675
        %v677 = vpop.f32.mrb[0].mxu0
        %v678 = vadd.f32 %v429, %v677
        %v679 = vpop.f32.mrb[0].mxu0
        %680 = vmatprep.mubr.f32.mxu0 0.0
        %v681 = vand.u32 %v193, 4294901760
        %682 = vmatmul.mubr.f32.gmra.mrb[0].mxu0 %v681
        %v683 = vpop.f32.mrb[0].mxu0
        %v684 = vadd.f32 %v439, %v683
        %v685 = vpop.f32.mrb[0].mxu0
        %686 = vmatprep.mubr.f32.mxu0 0.0
        %v687 = vand.u32 %v194, 4294901760
        %688 = vmatmul.mubr.f32.gmra.mrb[0].mxu0 %v687
        %v689 = vpop.f32.mrb[0].mxu0
        %v690 = vadd.f32 %v449, %v689
        %v691 = vpop.f32.mrb[0].mxu0
        %692 = vdwg.mxu0
        %693 = vmatprep.subr.mxu0 0.0
        %v694 = vand.u32 %v195, 4294901760
        %v695 = vsub.f32 %v195, %v694
        %696 = vmatpush1.msra.mxu0 %v695
        %697 = vmatprep.subr.mxu0 0.0
        %v698 = vand.u32 %v196, 4294901760
        %v699 = vsub.f32 %v196, %v698
        %700 = vmatpush1.msra.mxu0 %v699
        %701 = vmatprep.subr.mxu0 0.0
        %v702 = vand.u32 %v197, 4294901760
        %v703 = vsub.f32 %v197, %v702
        %704 = vmatpush1.msra.mxu0 %v703
        %705 = vmatprep.subr.mxu0 0.0
        %v706 = vand.u32 %v198, 4294901760
        %v707 = vsub.f32 %v198, %v706
        %708 = vmatpush1.msra.mxu0 %v707
        %709 = vmatprep.subr.mxu0 0.0
        %v710 = vand.u32 %v199, 4294901760
        %v711 = vsub.f32 %v199, %v710
        %712 = vmatpush1.msra.mxu0 %v711
        %713 = vmatprep.subr.mxu0 0.0
        %v714 = vand.u32 %v200, 4294901760
        %v715 = vsub.f32 %v200, %v714
        %716 = vmatpush1.msra.mxu0 %v715
        %717 = vmatprep.subr.mxu0 0.0
        %v718 = vand.u32 %v201, 4294901760
        %v719 = vsub.f32 %v201, %v718
        %720 = vmatpush1.msra.mxu0 %v719
        %721 = vmatprep.subr.mxu0 0.0
        %v722 = vand.u32 %v202, 4294901760
        %v723 = vsub.f32 %v202, %v722
        %724 = vmatpush1.msra.mxu0 %v723
        %725 = vmatprep.subr.mxu0 0.0
        %v726 = vand.u32 %v203, 4294901760
        %v727 = vsub.f32 %v203, %v726
        %728 = vmatpush1.msra.mxu0 %v727
        %729 = vmatprep.subr.mxu0 0.0
        %v730 = vand.u32 %v204, 4294901760
        %v731 = vsub.f32 %v204, %v730
        %732 = vmatpush1.msra.mxu0 %v731
        %733 = vmatprep.subr.mxu0 0.0
        %v734 = vand.u32 %v205, 4294901760
        %v735 = vsub.f32 %v205, %v734
        %736 = vmatpush1.msra.mxu0 %v735
        %737 = vmatprep.subr.mxu0 0.0
        %v738 = vand.u32 %v206, 4294901760
        %v739 = vsub.f32 %v206, %v738
        %740 = vmatpush1.msra.mxu0 %v739
        %741 = vmatprep.subr.mxu0 0.0
        %v742 = vand.u32 %v207, 4294901760
        %v743 = vsub.f32 %v207, %v742
        %744 = vmatpush1.msra.mxu0 %v743
        %745 = vmatprep.subr.mxu0 0.0
        %v746 = vand.u32 %v208, 4294901760
        %v747 = vsub.f32 %v208, %v746
        %748 = vmatpush1.msra.mxu0 %v747
        %749 = vmatprep.subr.mxu0 0.0
        %v750 = vand.u32 %v209, 4294901760
        %v751 = vsub.f32 %v209, %v750
        %752 = vmatpush1.msra.mxu0 %v751
        %753 = vmatprep.subr.mxu0 0.0
        %v754 = vand.u32 %v210, 4294901760
        %v755 = vsub.f32 %v210, %v754
        %756 = vmatpush1.msra.mxu0 %v755
        %757 = vmatprep.subr.mxu0 0.0
        %758 = vmatpush1.msra.mxu0 0.0
        %759 = vmatprep.subr.mxu0 0.0
        %760 = vmatpush1.msra.mxu0 0.0
        %761 = vmatprep.subr.mxu0 0.0
        %762 = vmatpush1.msra.mxu0 0.0
        %763 = vmatprep.subr.mxu0 0.0
        %764 = vmatpush1.msra.mxu0 0.0
        %765 = vmatprep.subr.mxu0 0.0
        %766 = vmatpush1.msra.mxu0 0.0
        %767 = vmatprep.subr.mxu0 0.0
        %768 = vmatpush1.msra.mxu0 0.0
        %769 = vmatprep.subr.mxu0 0.0
        %770 = vmatpush1.msra.mxu0 0.0
        %771 = vmatprep.subr.mxu0 0.0
        %772 = vmatpush1.msra.mxu0 0.0
        %773 = vmatprep.subr.mxu0 0.0
        %774 = vmatpush1.msra.mxu0 0.0
        %775 = vmatprep.subr.mxu0 0.0
        %776 = vmatpush1.msra.mxu0 0.0
        %777 = vmatprep.subr.mxu0 0.0
        %778 = vmatpush1.msra.mxu0 0.0
        %779 = vmatprep.subr.mxu0 0.0
        %780 = vmatpush1.msra.mxu0 0.0
        %781 = vmatprep.subr.mxu0 0.0
        %782 = vmatpush1.msra.mxu0 0.0
        %783 = vmatprep.subr.mxu0 0.0
        %784 = vmatpush1.msra.mxu0 0.0
        %785 = vmatprep.subr.mxu0 0.0
        %786 = vmatpush1.msra.mxu0 0.0
        %787 = vmatprep.subr.mxu0 0.0
        %788 = vmatpush1.msra.mxu0 0.0
        %789 = vmatprep.mubr.f32.mxu0 0.0
        %v790 = vand.u32 %v179, 4294901760
        %v791 = vsub.f32 %v179, %v790
        %792 = vmatmul.mubr.f32.gmra.mrb[0].mxu0 %v791
        %v793 = vpop.f32.mrb[0].mxu0
        %v794 = vadd.f32 %v600, %v793
        %v795 = vpop.f32.mrb[0].mxu0
        %796 = vmatprep.mubr.f32.mxu0 0.0
        %v797 = vand.u32 %v180, 4294901760
        %v798 = vsub.f32 %v180, %v797
        %799 = vmatmul.mubr.f32.gmra.mrb[0].mxu0 %v798
        %v800 = vpop.f32.mrb[0].mxu0
        %v801 = vadd.f32 %v606, %v800
        %v802 = vpop.f32.mrb[0].mxu0
        %803 = vmatprep.mubr.f32.mxu0 0.0
        %v804 = vand.u32 %v181, 4294901760
        %v805 = vsub.f32 %v181, %v804
        %806 = vmatmul.mubr.f32.gmra.mrb[0].mxu0 %v805
        %v807 = vpop.f32.mrb[0].mxu0
        %v808 = vadd.f32 %v612, %v807
        %v809 = vpop.f32.mrb[0].mxu0
        %810 = vmatprep.mubr.f32.mxu0 0.0
        %v811 = vand.u32 %v182, 4294901760
        %v812 = vsub.f32 %v182, %v811
        %813 = vmatmul.mubr.f32.gmra.mrb[0].mxu0 %v812
        %v814 = vpop.f32.mrb[0].mxu0
        %v815 = vadd.f32 %v618, %v814
        %v816 = vpop.f32.mrb[0].mxu0
        %817 = vmatprep.mubr.f32.mxu0 0.0
        %v818 = vand.u32 %v183, 4294901760
        %v819 = vsub.f32 %v183, %v818
        %820 = vmatmul.mubr.f32.gmra.mrb[0].mxu0 %v819
        %v821 = vpop.f32.mrb[0].mxu0
        %v822 = vadd.f32 %v624, %v821
        %v823 = vpop.f32.mrb[0].mxu0
        %824 = vmatprep.mubr.f32.mxu0 0.0
        %v825 = vand.u32 %v184, 4294901760
        %v826 = vsub.f32 %v184, %v825
        %827 = vmatmul.mubr.f32.gmra.mrb[0].mxu0 %v826
        %v828 = vpop.f32.mrb[0].mxu0
        %v829 = vadd.f32 %v630, %v828
        %v830 = vpop.f32.mrb[0].mxu0
        %831 = vmatprep.mubr.f32.mxu0 0.0
        %v832 = vand.u32 %v185, 4294901760
        %v833 = vsub.f32 %v185, %v832
        %834 = vmatmul.mubr.f32.gmra.mrb[0].mxu0 %v833
        %v835 = vpop.f32.mrb[0].mxu0
        %v836 = vadd.f32 %v636, %v835
        %v837 = vpop.f32.mrb[0].mxu0
        %838 = vmatprep.mubr.f32.mxu0 0.0
        %v839 = vand.u32 %v186, 4294901760
        %v840 = vsub.f32 %v186, %v839
        %841 = vmatmul.mubr.f32.gmra.mrb[0].mxu0 %v840
        %v842 = vpop.f32.mrb[0].mxu0
        %v843 = vadd.f32 %v642, %v842
        %v844 = vpop.f32.mrb[0].mxu0
        %845 = vmatprep.mubr.f32.mxu0 0.0
        %v846 = vand.u32 %v187, 4294901760
        %v847 = vsub.f32 %v187, %v846
        %848 = vmatmul.mubr.f32.gmra.mrb[0].mxu0 %v847
        %v849 = vpop.f32.mrb[0].mxu0
        %v850 = vadd.f32 %v648, %v849
        %v851 = vpop.f32.mrb[0].mxu0
        %852 = vmatprep.mubr.f32.mxu0 0.0
        %v853 = vand.u32 %v188, 4294901760
        %v854 = vsub.f32 %v188, %v853
        %855 = vmatmul.mubr.f32.gmra.mrb[0].mxu0 %v854
        %v856 = vpop.f32.mrb[0].mxu0
        %v857 = vadd.f32 %v654, %v856
        %v858 = vpop.f32.mrb[0].mxu0
        %859 = vmatprep.mubr.f32.mxu0 0.0
        %v860 = vand.u32 %v189, 4294901760
        %v861 = vsub.f32 %v189, %v860
        %862 = vmatmul.mubr.f32.gmra.mrb[0].mxu0 %v861
        %v863 = vpop.f32.mrb[0].mxu0
        %v864 = vadd.f32 %v660, %v863
        %v865 = vpop.f32.mrb[0].mxu0
        %866 = vmatprep.mubr.f32.mxu0 0.0
        %v867 = vand.u32 %v190, 4294901760
        %v868 = vsub.f32 %v190, %v867
        %869 = vmatmul.mubr.f32.gmra.mrb[0].mxu0 %v868
        %v870 = vpop.f32.mrb[0].mxu0
        %v871 = vadd.f32 %v666, %v870
        %v872 = vpop.f32.mrb[0].mxu0
        %873 = vmatprep.mubr.f32.mxu0 0.0
        %v874 = vand.u32 %v191, 4294901760
        %v875 = vsub.f32 %v191, %v874
        %876 = vmatmul.mubr.f32.gmra.mrb[0].mxu0 %v875
        %v877 = vpop.f32.mrb[0].mxu0
        %v878 = vadd.f32 %v672, %v877
        %v879 = vpop.f32.mrb[0].mxu0
        %880 = vmatprep.mubr.f32.mxu0 0.0
        %v881 = vand.u32 %v192, 4294901760
        %v882 = vsub.f32 %v192, %v881
        %883 = vmatmul.mubr.f32.gmra.mrb[0].mxu0 %v882
        %v884 = vpop.f32.mrb[0].mxu0
        %v885 = vadd.f32 %v678, %v884
        %v886 = vpop.f32.mrb[0].mxu0
        %887 = vmatprep.mubr.f32.mxu0 0.0
        %v888 = vand.u32 %v193, 4294901760
        %v889 = vsub.f32 %v193, %v888
        %890 = vmatmul.mubr.f32.gmra.mrb[0].mxu0 %v889
        %v891 = vpop.f32.mrb[0].mxu0
        %v892 = vadd.f32 %v684, %v891
        %v893 = vpop.f32.mrb[0].mxu0
        %894 = vmatprep.mubr.f32.mxu0 0.0
        %v895 = vand.u32 %v194, 4294901760
        %v896 = vsub.f32 %v194, %v895
        %897 = vmatmul.mubr.f32.gmra.mrb[0].mxu0 %v896
        %v898 = vpop.f32.mrb[0].mxu0
        %v899 = vadd.f32 %v690, %v898
        %v900 = vpop.f32.mrb[0].mxu0
        %901 = vdwg.mxu0
        %902 = vmatprep.subr.mxu0 0.0
        %v903 = vand.u32 %v195, 4294901760
        %904 = vmatpush1.msra.mxu0 %v903
        %905 = vmatprep.subr.mxu0 0.0
        %v906 = vand.u32 %v196, 4294901760
        %907 = vmatpush1.msra.mxu0 %v906
        %908 = vmatprep.subr.mxu0 0.0
        %v909 = vand.u32 %v197, 4294901760
        %910 = vmatpush1.msra.mxu0 %v909
        %911 = vmatprep.subr.mxu0 0.0
        %v912 = vand.u32 %v198, 4294901760
        %913 = vmatpush1.msra.mxu0 %v912
        %914 = vmatprep.subr.mxu0 0.0
        %v915 = vand.u32 %v199, 4294901760
        %916 = vmatpush1.msra.mxu0 %v915
        %917 = vmatprep.subr.mxu0 0.0
        %v918 = vand.u32 %v200, 4294901760
        %919 = vmatpush1.msra.mxu0 %v918
        %920 = vmatprep.subr.mxu0 0.0
        %v921 = vand.u32 %v201, 4294901760
        %922 = vmatpush1.msra.mxu0 %v921
        %923 = vmatprep.subr.mxu0 0.0
        %v924 = vand.u32 %v202, 4294901760
        %925 = vmatpush1.msra.mxu0 %v924
        %926 = vmatprep.subr.mxu0 0.0
        %v927 = vand.u32 %v203, 4294901760
        %928 = vmatpush1.msra.mxu0 %v927
        %929 = vmatprep.subr.mxu0 0.0
        %v930 = vand.u32 %v204, 4294901760
        %931 = vmatpush1.msra.mxu0 %v930
        %932 = vmatprep.subr.mxu0 0.0
        %v933 = vand.u32 %v205, 4294901760
        %934 = vmatpush1.msra.mxu0 %v933
        %935 = vmatprep.subr.mxu0 0.0
        %v936 = vand.u32 %v206, 4294901760
        %937 = vmatpush1.msra.mxu0 %v936
        %938 = vmatprep.subr.mxu0 0.0
        %v939 = vand.u32 %v207, 4294901760
        %940 = vmatpush1.msra.mxu0 %v939
        %941 = vmatprep.subr.mxu0 0.0
        %v942 = vand.u32 %v208, 4294901760
        %943 = vmatpush1.msra.mxu0 %v942
        %944 = vmatprep.subr.mxu0 0.0
        %v945 = vand.u32 %v209, 4294901760
        %946 = vmatpush1.msra.mxu0 %v945
        %947 = vmatprep.subr.mxu0 0.0
        %v948 = vand.u32 %v210, 4294901760
        %949 = vmatpush1.msra.mxu0 %v948
        %950 = vmatprep.subr.mxu0 0.0
        %951 = vmatpush1.msra.mxu0 0.0
        %952 = vmatprep.subr.mxu0 0.0
        %953 = vmatpush1.msra.mxu0 0.0
        %954 = vmatprep.subr.mxu0 0.0
        %955 = vmatpush1.msra.mxu0 0.0
        %956 = vmatprep.subr.mxu0 0.0
        %957 = vmatpush1.msra.mxu0 0.0
        %958 = vmatprep.subr.mxu0 0.0
        %959 = vmatpush1.msra.mxu0 0.0
        %960 = vmatprep.subr.mxu0 0.0
        %961 = vmatpush1.msra.mxu0 0.0
        %962 = vmatprep.subr.mxu0 0.0
        %963 = vmatpush1.msra.mxu0 0.0
        %964 = vmatprep.subr.mxu0 0.0
        %965 = vmatpush1.msra.mxu0 0.0
        %966 = vmatprep.subr.mxu0 0.0
        %967 = vmatpush1.msra.mxu0 0.0
        %968 = vmatprep.subr.mxu0 0.0
        %969 = vmatpush1.msra.mxu0 0.0
        %970 = vmatprep.subr.mxu0 0.0
        %971 = vmatpush1.msra.mxu0 0.0
        %972 = vmatprep.subr.mxu0 0.0
        %973 = vmatpush1.msra.mxu0 0.0
        %974 = vmatprep.subr.mxu0 0.0
        %975 = vmatpush1.msra.mxu0 0.0
        %976 = vmatprep.subr.mxu0 0.0
        %977 = vmatpush1.msra.mxu0 0.0
        %978 = vmatprep.subr.mxu0 0.0
        %979 = vmatpush1.msra.mxu0 0.0
        %980 = vmatprep.subr.mxu0 0.0
        %981 = vmatpush1.msra.mxu0 0.0
        %982 = vmatprep.mubr.f32.mxu0 0.0
        %v983 = vand.u32 %v179, 4294901760
        %v984 = vsub.f32 %v179, %v983
        %v985 = vand.u32 %v984, 4294901760
        %986 = vmatmul.mubr.f32.gmra.mrb[0].mxu0 %v985
        %v987 = vpop.f32.mrb[0].mxu0
        %v988 = vadd.f32 %v794, %v987
        %v989 = vpop.f32.mrb[0].mxu0
        %990 = vmatprep.mubr.f32.mxu0 0.0
        %v991 = vand.u32 %v180, 4294901760
        %v992 = vsub.f32 %v180, %v991
        %v993 = vand.u32 %v992, 4294901760
        %994 = vmatmul.mubr.f32.gmra.mrb[0].mxu0 %v993
        %v995 = vpop.f32.mrb[0].mxu0
        %v996 = vadd.f32 %v801, %v995
        %v997 = vpop.f32.mrb[0].mxu0
        %998 = vmatprep.mubr.f32.mxu0 0.0
        %v999 = vand.u32 %v181, 4294901760
        %v1000 = vsub.f32 %v181, %v999
        %v1001 = vand.u32 %v1000, 4294901760
        %1002 = vmatmul.mubr.f32.gmra.mrb[0].mxu0 %v1001
        %v1003 = vpop.f32.mrb[0].mxu0
        %v1004 = vadd.f32 %v808, %v1003
        %v1005 = vpop.f32.mrb[0].mxu0
        %1006 = vmatprep.mubr.f32.mxu0 0.0
        %v1007 = vand.u32 %v182, 4294901760
        %v1008 = vsub.f32 %v182, %v1007
        %v1009 = vand.u32 %v1008, 4294901760
        %1010 = vmatmul.mubr.f32.gmra.mrb[0].mxu0 %v1009
        %v1011 = vpop.f32.mrb[0].mxu0
        %v1012 = vadd.f32 %v815, %v1011
        %v1013 = vpop.f32.mrb[0].mxu0
        %1014 = vmatprep.mubr.f32.mxu0 0.0
        %v1015 = vand.u32 %v183, 4294901760
        %v1016 = vsub.f32 %v183, %v1015
        %v1017 = vand.u32 %v1016, 4294901760
        %1018 = vmatmul.mubr.f32.gmra.mrb[0].mxu0 %v1017
        %v1019 = vpop.f32.mrb[0].mxu0
        %v1020 = vadd.f32 %v822, %v1019
        %v1021 = vpop.f32.mrb[0].mxu0
        %1022 = vmatprep.mubr.f32.mxu0 0.0
        %v1023 = vand.u32 %v184, 4294901760
        %v1024 = vsub.f32 %v184, %v1023
        %v1025 = vand.u32 %v1024, 4294901760
        %1026 = vmatmul.mubr.f32.gmra.mrb[0].mxu0 %v1025
        %v1027 = vpop.f32.mrb[0].mxu0
        %v1028 = vadd.f32 %v829, %v1027
        %v1029 = vpop.f32.mrb[0].mxu0
        %1030 = vmatprep.mubr.f32.mxu0 0.0
        %v1031 = vand.u32 %v185, 4294901760
        %v1032 = vsub.f32 %v185, %v1031
        %v1033 = vand.u32 %v1032, 4294901760
        %1034 = vmatmul.mubr.f32.gmra.mrb[0].mxu0 %v1033
        %v1035 = vpop.f32.mrb[0].mxu0
        %v1036 = vadd.f32 %v836, %v1035
        %v1037 = vpop.f32.mrb[0].mxu0
        %1038 = vmatprep.mubr.f32.mxu0 0.0
        %v1039 = vand.u32 %v186, 4294901760
        %v1040 = vsub.f32 %v186, %v1039
        %v1041 = vand.u32 %v1040, 4294901760
        %1042 = vmatmul.mubr.f32.gmra.mrb[0].mxu0 %v1041
        %v1043 = vpop.f32.mrb[0].mxu0
        %v1044 = vadd.f32 %v843, %v1043
        %v1045 = vpop.f32.mrb[0].mxu0
        %1046 = vmatprep.mubr.f32.mxu0 0.0
        %v1047 = vand.u32 %v187, 4294901760
        %v1048 = vsub.f32 %v187, %v1047
        %v1049 = vand.u32 %v1048, 4294901760
        %1050 = vmatmul.mubr.f32.gmra.mrb[0].mxu0 %v1049
        %v1051 = vpop.f32.mrb[0].mxu0
        %v1052 = vadd.f32 %v850, %v1051
        %v1053 = vpop.f32.mrb[0].mxu0
        %1054 = vmatprep.mubr.f32.mxu0 0.0
        %v1055 = vand.u32 %v188, 4294901760
        %v1056 = vsub.f32 %v188, %v1055
        %v1057 = vand.u32 %v1056, 4294901760
        %1058 = vmatmul.mubr.f32.gmra.mrb[0].mxu0 %v1057
        %v1059 = vpop.f32.mrb[0].mxu0
        %v1060 = vadd.f32 %v857, %v1059
        %v1061 = vpop.f32.mrb[0].mxu0
        %1062 = vmatprep.mubr.f32.mxu0 0.0
        %v1063 = vand.u32 %v189, 4294901760
        %v1064 = vsub.f32 %v189, %v1063
        %v1065 = vand.u32 %v1064, 4294901760
        %1066 = vmatmul.mubr.f32.gmra.mrb[0].mxu0 %v1065
        %v1067 = vpop.f32.mrb[0].mxu0
        %v1068 = vadd.f32 %v864, %v1067
        %v1069 = vpop.f32.mrb[0].mxu0
        %1070 = vmatprep.mubr.f32.mxu0 0.0
        %v1071 = vand.u32 %v190, 4294901760
        %v1072 = vsub.f32 %v190, %v1071
        %v1073 = vand.u32 %v1072, 4294901760
        %1074 = vmatmul.mubr.f32.gmra.mrb[0].mxu0 %v1073
        %v1075 = vpop.f32.mrb[0].mxu0
        %v1076 = vadd.f32 %v871, %v1075
        %v1077 = vpop.f32.mrb[0].mxu0
        %1078 = vmatprep.mubr.f32.mxu0 0.0
        %v1079 = vand.u32 %v191, 4294901760
        %v1080 = vsub.f32 %v191, %v1079
        %v1081 = vand.u32 %v1080, 4294901760
        %1082 = vmatmul.mubr.f32.gmra.mrb[0].mxu0 %v1081
        %v1083 = vpop.f32.mrb[0].mxu0
        %v1084 = vadd.f32 %v878, %v1083
        %v1085 = vpop.f32.mrb[0].mxu0
        %1086 = vmatprep.mubr.f32.mxu0 0.0
        %v1087 = vand.u32 %v192, 4294901760
        %v1088 = vsub.f32 %v192, %v1087
        %v1089 = vand.u32 %v1088, 4294901760
        %1090 = vmatmul.mubr.f32.gmra.mrb[0].mxu0 %v1089
        %v1091 = vpop.f32.mrb[0].mxu0
        %v1092 = vadd.f32 %v885, %v1091
        %v1093 = vpop.f32.mrb[0].mxu0
        %1094 = vmatprep.mubr.f32.mxu0 0.0
        %v1095 = vand.u32 %v193, 4294901760
        %v1096 = vsub.f32 %v193, %v1095
        %v1097 = vand.u32 %v1096, 4294901760
        %1098 = vmatmul.mubr.f32.gmra.mrb[0].mxu0 %v1097
        %v1099 = vpop.f32.mrb[0].mxu0
        %v1100 = vadd.f32 %v892, %v1099
        %v1101 = vpop.f32.mrb[0].mxu0
        %1102 = vmatprep.mubr.f32.mxu0 0.0
        %v1103 = vand.u32 %v194, 4294901760
        %v1104 = vsub.f32 %v194, %v1103
        %v1105 = vand.u32 %v1104, 4294901760
        %1106 = vmatmul.mubr.f32.gmra.mrb[0].mxu0 %v1105
        %v1107 = vpop.f32.mrb[0].mxu0
        %v1108 = vadd.f32 %v899, %v1107
        %v1109 = vpop.f32.mrb[0].mxu0
        %1110 = vdwg.mxu0
        %1111 = vmatprep.subr.mxu0 0.0
        %v1112 = vand.u32 %v195, 4294901760
        %v1113 = vsub.f32 %v195, %v1112
        %v1114 = vand.u32 %v1113, 4294901760
        %1115 = vmatpush1.msra.mxu0 %v1114
        %1116 = vmatprep.subr.mxu0 0.0
        %v1117 = vand.u32 %v196, 4294901760
        %v1118 = vsub.f32 %v196, %v1117
        %v1119 = vand.u32 %v1118, 4294901760
        %1120 = vmatpush1.msra.mxu0 %v1119
        %1121 = vmatprep.subr.mxu0 0.0
        %v1122 = vand.u32 %v197, 4294901760
        %v1123 = vsub.f32 %v197, %v1122
        %v1124 = vand.u32 %v1123, 4294901760
        %1125 = vmatpush1.msra.mxu0 %v1124
        %1126 = vmatprep.subr.mxu0 0.0
        %v1127 = vand.u32 %v198, 4294901760
        %v1128 = vsub.f32 %v198, %v1127
        %v1129 = vand.u32 %v1128, 4294901760
        %1130 = vmatpush1.msra.mxu0 %v1129
        %1131 = vmatprep.subr.mxu0 0.0
        %v1132 = vand.u32 %v199, 4294901760
        %v1133 = vsub.f32 %v199, %v1132
        %v1134 = vand.u32 %v1133, 4294901760
        %1135 = vmatpush1.msra.mxu0 %v1134
        %1136 = vmatprep.subr.mxu0 0.0
        %v1137 = vand.u32 %v200, 4294901760
        %v1138 = vsub.f32 %v200, %v1137
        %v1139 = vand.u32 %v1138, 4294901760
        %1140 = vmatpush1.msra.mxu0 %v1139
        %1141 = vmatprep.subr.mxu0 0.0
        %v1142 = vand.u32 %v201, 4294901760
        %v1143 = vsub.f32 %v201, %v1142
        %v1144 = vand.u32 %v1143, 4294901760
        %1145 = vmatpush1.msra.mxu0 %v1144
        %1146 = vmatprep.subr.mxu0 0.0
        %v1147 = vand.u32 %v202, 4294901760
        %v1148 = vsub.f32 %v202, %v1147
        %v1149 = vand.u32 %v1148, 4294901760
        %1150 = vmatpush1.msra.mxu0 %v1149
        %1151 = vmatprep.subr.mxu0 0.0
        %v1152 = vand.u32 %v203, 4294901760
        %v1153 = vsub.f32 %v203, %v1152
        %v1154 = vand.u32 %v1153, 4294901760
        %1155 = vmatpush1.msra.mxu0 %v1154
        %1156 = vmatprep.subr.mxu0 0.0
        %v1157 = vand.u32 %v204, 4294901760
        %v1158 = vsub.f32 %v204, %v1157
        %v1159 = vand.u32 %v1158, 4294901760
        %1160 = vmatpush1.msra.mxu0 %v1159
        %1161 = vmatprep.subr.mxu0 0.0
        %v1162 = vand.u32 %v205, 4294901760
        %v1163 = vsub.f32 %v205, %v1162
        %v1164 = vand.u32 %v1163, 4294901760
        %1165 = vmatpush1.msra.mxu0 %v1164
        %1166 = vmatprep.subr.mxu0 0.0
        %v1167 = vand.u32 %v206, 4294901760
        %v1168 = vsub.f32 %v206, %v1167
        %v1169 = vand.u32 %v1168, 4294901760
        %1170 = vmatpush1.msra.mxu0 %v1169
        %1171 = vmatprep.subr.mxu0 0.0
        %v1172 = vand.u32 %v207, 4294901760
        %v1173 = vsub.f32 %v207, %v1172
        %v1174 = vand.u32 %v1173, 4294901760
        %1175 = vmatpush1.msra.mxu0 %v1174
        %1176 = vmatprep.subr.mxu0 0.0
        %v1177 = vand.u32 %v208, 4294901760
        %v1178 = vsub.f32 %v208, %v1177
        %v1179 = vand.u32 %v1178, 4294901760
        %1180 = vmatpush1.msra.mxu0 %v1179
        %1181 = vmatprep.subr.mxu0 0.0
        %v1182 = vand.u32 %v209, 4294901760
        %v1183 = vsub.f32 %v209, %v1182
        %v1184 = vand.u32 %v1183, 4294901760
        %1185 = vmatpush1.msra.mxu0 %v1184
        %1186 = vmatprep.subr.mxu0 0.0
        %v1187 = vand.u32 %v210, 4294901760
        %v1188 = vsub.f32 %v210, %v1187
        %v1189 = vand.u32 %v1188, 4294901760
        %1190 = vmatpush1.msra.mxu0 %v1189
        %1191 = vmatprep.subr.mxu0 0.0
        %1192 = vmatpush1.msra.mxu0 0.0
        %1193 = vmatprep.subr.mxu0 0.0
        %1194 = vmatpush1.msra.mxu0 0.0
        %1195 = vmatprep.subr.mxu0 0.0
        %1196 = vmatpush1.msra.mxu0 0.0
        %1197 = vmatprep.subr.mxu0 0.0
        %1198 = vmatpush1.msra.mxu0 0.0
        %1199 = vmatprep.subr.mxu0 0.0
        %1200 = vmatpush1.msra.mxu0 0.0
        %1201 = vmatprep.subr.mxu0 0.0
        %1202 = vmatpush1.msra.mxu0 0.0
        %1203 = vmatprep.subr.mxu0 0.0
        %1204 = vmatpush1.msra.mxu0 0.0
        %1205 = vmatprep.subr.mxu0 0.0
        %1206 = vmatpush1.msra.mxu0 0.0
        %1207 = vmatprep.subr.mxu0 0.0
        %1208 = vmatpush1.msra.mxu0 0.0
        %1209 = vmatprep.subr.mxu0 0.0
        %1210 = vmatpush1.msra.mxu0 0.0
        %1211 = vmatprep.subr.mxu0 0.0
        %1212 = vmatpush1.msra.mxu0 0.0
        %1213 = vmatprep.subr.mxu0 0.0
        %1214 = vmatpush1.msra.mxu0 0.0
        %1215 = vmatprep.subr.mxu0 0.0
        %1216 = vmatpush1.msra.mxu0 0.0
        %1217 = vmatprep.subr.mxu0 0.0
        %1218 = vmatpush1.msra.mxu0 0.0
        %1219 = vmatprep.subr.mxu0 0.0
        %1220 = vmatpush1.msra.mxu0 0.0
        %1221 = vmatprep.subr.mxu0 0.0
        %1222 = vmatpush1.msra.mxu0 0.0
        %1223 = vmatprep.mubr.f32.mxu0 0.0
        %v1224 = vand.u32 %v179, 4294901760
        %1225 = vmatmul.mubr.f32.gmra.mrb[0].mxu0 %v1224
        %v1226 = vpop.f32.mrb[0].mxu0
        %v1227 = vadd.f32 %v988, %v1226
        %v1228 = vpop.f32.mrb[0].mxu0
        %1229 = vmatprep.mubr.f32.mxu0 0.0
        %v1230 = vand.u32 %v180, 4294901760
        %1231 = vmatmul.mubr.f32.gmra.mrb[0].mxu0 %v1230
        %v1232 = vpop.f32.mrb[0].mxu0
        %v1233 = vadd.f32 %v996, %v1232
        %v1234 = vpop.f32.mrb[0].mxu0
        %1235 = vmatprep.mubr.f32.mxu0 0.0
        %v1236 = vand.u32 %v181, 4294901760
        %1237 = vmatmul.mubr.f32.gmra.mrb[0].mxu0 %v1236
        %v1238 = vpop.f32.mrb[0].mxu0
        %v1239 = vadd.f32 %v1004, %v1238
        %v1240 = vpop.f32.mrb[0].mxu0
        %1241 = vmatprep.mubr.f32.mxu0 0.0
        %v1242 = vand.u32 %v182, 4294901760
        %1243 = vmatmul.mubr.f32.gmra.mrb[0].mxu0 %v1242
        %v1244 = vpop.f32.mrb[0].mxu0
        %v1245 = vadd.f32 %v1012, %v1244
        %v1246 = vpop.f32.mrb[0].mxu0
        %1247 = vmatprep.mubr.f32.mxu0 0.0
        %v1248 = vand.u32 %v183, 4294901760
        %1249 = vmatmul.mubr.f32.gmra.mrb[0].mxu0 %v1248
        %v1250 = vpop.f32.mrb[0].mxu0
        %v1251 = vadd.f32 %v1020, %v1250
        %v1252 = vpop.f32.mrb[0].mxu0
        %1253 = vmatprep.mubr.f32.mxu0 0.0
        %v1254 = vand.u32 %v184, 4294901760
        %1255 = vmatmul.mubr.f32.gmra.mrb[0].mxu0 %v1254
        %v1256 = vpop.f32.mrb[0].mxu0
        %v1257 = vadd.f32 %v1028, %v1256
        %v1258 = vpop.f32.mrb[0].mxu0
        %1259 = vmatprep.mubr.f32.mxu0 0.0
        %v1260 = vand.u32 %v185, 4294901760
        %1261 = vmatmul.mubr.f32.gmra.mrb[0].mxu0 %v1260
        %v1262 = vpop.f32.mrb[0].mxu0
        %v1263 = vadd.f32 %v1036, %v1262
        %v1264 = vpop.f32.mrb[0].mxu0
        %1265 = vmatprep.mubr.f32.mxu0 0.0
        %v1266 = vand.u32 %v186, 4294901760
        %1267 = vmatmul.mubr.f32.gmra.mrb[0].mxu0 %v1266
        %v1268 = vpop.f32.mrb[0].mxu0
        %v1269 = vadd.f32 %v1044, %v1268
        %v1270 = vpop.f32.mrb[0].mxu0
        %1271 = vmatprep.mubr.f32.mxu0 0.0
        %v1272 = vand.u32 %v187, 4294901760
        %1273 = vmatmul.mubr.f32.gmra.mrb[0].mxu0 %v1272
        %v1274 = vpop.f32.mrb[0].mxu0
        %v1275 = vadd.f32 %v1052, %v1274
        %v1276 = vpop.f32.mrb[0].mxu0
        %1277 = vmatprep.mubr.f32.mxu0 0.0
        %v1278 = vand.u32 %v188, 4294901760
        %1279 = vmatmul.mubr.f32.gmra.mrb[0].mxu0 %v1278
        %v1280 = vpop.f32.mrb[0].mxu0
        %v1281 = vadd.f32 %v1060, %v1280
        %v1282 = vpop.f32.mrb[0].mxu0
        %1283 = vmatprep.mubr.f32.mxu0 0.0
        %v1284 = vand.u32 %v189, 4294901760
        %1285 = vmatmul.mubr.f32.gmra.mrb[0].mxu0 %v1284
        %v1286 = vpop.f32.mrb[0].mxu0
        %v1287 = vadd.f32 %v1068, %v1286
        %v1288 = vpop.f32.mrb[0].mxu0
        %1289 = vmatprep.mubr.f32.mxu0 0.0
        %v1290 = vand.u32 %v190, 4294901760
        %1291 = vmatmul.mubr.f32.gmra.mrb[0].mxu0 %v1290
        %v1292 = vpop.f32.mrb[0].mxu0
        %v1293 = vadd.f32 %v1076, %v1292
        %v1294 = vpop.f32.mrb[0].mxu0
        %1295 = vmatprep.mubr.f32.mxu0 0.0
        %v1296 = vand.u32 %v191, 4294901760
        %1297 = vmatmul.mubr.f32.gmra.mrb[0].mxu0 %v1296
        %v1298 = vpop.f32.mrb[0].mxu0
        %v1299 = vadd.f32 %v1084, %v1298
        %v1300 = vpop.f32.mrb[0].mxu0
        %1301 = vmatprep.mubr.f32.mxu0 0.0
        %v1302 = vand.u32 %v192, 4294901760
        %1303 = vmatmul.mubr.f32.gmra.mrb[0].mxu0 %v1302
        %v1304 = vpop.f32.mrb[0].mxu0
        %v1305 = vadd.f32 %v1092, %v1304
        %v1306 = vpop.f32.mrb[0].mxu0
        %1307 = vmatprep.mubr.f32.mxu0 0.0
        %v1308 = vand.u32 %v193, 4294901760
        %1309 = vmatmul.mubr.f32.gmra.mrb[0].mxu0 %v1308
        %v1310 = vpop.f32.mrb[0].mxu0
        %v1311 = vadd.f32 %v1100, %v1310
        %v1312 = vpop.f32.mrb[0].mxu0
        %1313 = vmatprep.mubr.f32.mxu0 0.0
        %v1314 = vand.u32 %v194, 4294901760
        %1315 = vmatmul.mubr.f32.gmra.mrb[0].mxu0 %v1314
        %v1316 = vpop.f32.mrb[0].mxu0
        %v1317 = vadd.f32 %v1108, %v1316
        %v1318 = vpop.f32.mrb[0].mxu0
        %1319 = vdwg.mxu0
        %1320 = vmatprep.subr.mxu0 0.0
        %v1321 = vand.u32 %v195, 4294901760
        %1322 = vmatpush1.msra.mxu0 %v1321
        %1323 = vmatprep.subr.mxu0 0.0
        %v1324 = vand.u32 %v196, 4294901760
        %1325 = vmatpush1.msra.mxu0 %v1324
        %1326 = vmatprep.subr.mxu0 0.0
        %v1327 = vand.u32 %v197, 4294901760
        %1328 = vmatpush1.msra.mxu0 %v1327
        %1329 = vmatprep.subr.mxu0 0.0
        %v1330 = vand.u32 %v198, 4294901760
        %1331 = vmatpush1.msra.mxu0 %v1330
        %1332 = vmatprep.subr.mxu0 0.0
        %v1333 = vand.u32 %v199, 4294901760
        %1334 = vmatpush1.msra.mxu0 %v1333
        %1335 = vmatprep.subr.mxu0 0.0
        %v1336 = vand.u32 %v200, 4294901760
        %1337 = vmatpush1.msra.mxu0 %v1336
        %1338 = vmatprep.subr.mxu0 0.0
        %v1339 = vand.u32 %v201, 4294901760
        %1340 = vmatpush1.msra.mxu0 %v1339
        %1341 = vmatprep.subr.mxu0 0.0
        %v1342 = vand.u32 %v202, 4294901760
        %1343 = vmatpush1.msra.mxu0 %v1342
        %1344 = vmatprep.subr.mxu0 0.0
        %v1345 = vand.u32 %v203, 4294901760
        %1346 = vmatpush1.msra.mxu0 %v1345
        %1347 = vmatprep.subr.mxu0 0.0
        %v1348 = vand.u32 %v204, 4294901760
        %1349 = vmatpush1.msra.mxu0 %v1348
        %1350 = vmatprep.subr.mxu0 0.0
        %v1351 = vand.u32 %v205, 4294901760
        %1352 = vmatpush1.msra.mxu0 %v1351
        %1353 = vmatprep.subr.mxu0 0.0
        %v1354 = vand.u32 %v206, 4294901760
        %1355 = vmatpush1.msra.mxu0 %v1354
        %1356 = vmatprep.subr.mxu0 0.0
        %v1357 = vand.u32 %v207, 4294901760
        %1358 = vmatpush1.msra.mxu0 %v1357
        %1359 = vmatprep.subr.mxu0 0.0
        %v1360 = vand.u32 %v208, 4294901760
        %1361 = vmatpush1.msra.mxu0 %v1360
        %1362 = vmatprep.subr.mxu0 0.0
        %v1363 = vand.u32 %v209, 4294901760
        %1364 = vmatpush1.msra.mxu0 %v1363
        %1365 = vmatprep.subr.mxu0 0.0
        %v1366 = vand.u32 %v210, 4294901760
        %1367 = vmatpush1.msra.mxu0 %v1366
        %1368 = vmatprep.subr.mxu0 0.0
        %1369 = vmatpush1.msra.mxu0 0.0
        %1370 = vmatprep.subr.mxu0 0.0
        %1371 = vmatpush1.msra.mxu0 0.0
        %1372 = vmatprep.subr.mxu0 0.0
        %1373 = vmatpush1.msra.mxu0 0.0
        %1374 = vmatprep.subr.mxu0 0.0
        %1375 = vmatpush1.msra.mxu0 0.0
        %1376 = vmatprep.subr.mxu0 0.0
        %1377 = vmatpush1.msra.mxu0 0.0
        %1378 = vmatprep.subr.mxu0 0.0
        %1379 = vmatpush1.msra.mxu0 0.0
        %1380 = vmatprep.subr.mxu0 0.0
        %1381 = vmatpush1.msra.mxu0 0.0
        %1382 = vmatprep.subr.mxu0 0.0
        %1383 = vmatpush1.msra.mxu0 0.0
        %1384 = vmatprep.subr.mxu0 0.0
        %1385 = vmatpush1.msra.mxu0 0.0
        %1386 = vmatprep.subr.mxu0 0.0
        %1387 = vmatpush1.msra.mxu0 0.0
        %1388 = vmatprep.subr.mxu0 0.0
        %1389 = vmatpush1.msra.mxu0 0.0
        %1390 = vmatprep.subr.mxu0 0.0
        %1391 = vmatpush1.msra.mxu0 0.0
        %1392 = vmatprep.subr.mxu0 0.0
        %1393 = vmatpush1.msra.mxu0 0.0
        %1394 = vmatprep.subr.mxu0 0.0
        %1395 = vmatpush1.msra.mxu0 0.0
        %1396 = vmatprep.subr.mxu0 0.0
        %1397 = vmatpush1.msra.mxu0 0.0
        %1398 = vmatprep.subr.mxu0 0.0
        %1399 = vmatpush1.msra.mxu0 0.0
        %1400 = vmatprep.mubr.f32.mxu0 0.0
        %v1401 = vand.u32 %v179, 4294901760
        %1402 = vmatmul.mubr.f32.gmra.mrb[0].mxu0 %v1401
        %v1403 = vpop.f32.mrb[0].mxu0
        %v1404 = vadd.f32 %v1227, %v1403
        %v1405 = vpop.f32.mrb[0].mxu0
        %1406 = vmatprep.mubr.f32.mxu0 0.0
        %v1407 = vand.u32 %v180, 4294901760
        %1408 = vmatmul.mubr.f32.gmra.mrb[0].mxu0 %v1407
        %v1409 = vpop.f32.mrb[0].mxu0
        %v1410 = vadd.f32 %v1233, %v1409
        %v1411 = vpop.f32.mrb[0].mxu0
        %1412 = vmatprep.mubr.f32.mxu0 0.0
        %v1413 = vand.u32 %v181, 4294901760
        %1414 = vmatmul.mubr.f32.gmra.mrb[0].mxu0 %v1413
        %v1415 = vpop.f32.mrb[0].mxu0
        %v1416 = vadd.f32 %v1239, %v1415
        %v1417 = vpop.f32.mrb[0].mxu0
        %1418 = vmatprep.mubr.f32.mxu0 0.0
        %v1419 = vand.u32 %v182, 4294901760
        %1420 = vmatmul.mubr.f32.gmra.mrb[0].mxu0 %v1419
        %v1421 = vpop.f32.mrb[0].mxu0
        %v1422 = vadd.f32 %v1245, %v1421
        %v1423 = vpop.f32.mrb[0].mxu0
        %1424 = vmatprep.mubr.f32.mxu0 0.0
        %v1425 = vand.u32 %v183, 4294901760
        %1426 = vmatmul.mubr.f32.gmra.mrb[0].mxu0 %v1425
        %v1427 = vpop.f32.mrb[0].mxu0
        %v1428 = vadd.f32 %v1251, %v1427
        %v1429 = vpop.f32.mrb[0].mxu0
        %1430 = vmatprep.mubr.f32.mxu0 0.0
        %v1431 = vand.u32 %v184, 4294901760
        %1432 = vmatmul.mubr.f32.gmra.mrb[0].mxu0 %v1431
        %v1433 = vpop.f32.mrb[0].mxu0
        %v1434 = vadd.f32 %v1257, %v1433
        %v1435 = vpop.f32.mrb[0].mxu0
        %1436 = vmatprep.mubr.f32.mxu0 0.0
        %v1437 = vand.u32 %v185, 4294901760
        %1438 = vmatmul.mubr.f32.gmra.mrb[0].mxu0 %v1437
        %v1439 = vpop.f32.mrb[0].mxu0
        %v1440 = vadd.f32 %v1263, %v1439
        %v1441 = vpop.f32.mrb[0].mxu0
        %1442 = vmatprep.mubr.f32.mxu0 0.0
        %v1443 = vand.u32 %v186, 4294901760
        %1444 = vmatmul.mubr.f32.gmra.mrb[0].mxu0 %v1443
        %v1445 = vpop.f32.mrb[0].mxu0
        %v1446 = vadd.f32 %v1269, %v1445
        %v1447 = vpop.f32.mrb[0].mxu0
        %1448 = vmatprep.mubr.f32.mxu0 0.0
        %v1449 = vand.u32 %v187, 4294901760
        %1450 = vmatmul.mubr.f32.gmra.mrb[0].mxu0 %v1449
        %v1451 = vpop.f32.mrb[0].mxu0
        %v1452 = vadd.f32 %v1275, %v1451
        %v1453 = vpop.f32.mrb[0].mxu0
        %1454 = vmatprep.mubr.f32.mxu0 0.0
        %v1455 = vand.u32 %v188, 4294901760
        %1456 = vmatmul.mubr.f32.gmra.mrb[0].mxu0 %v1455
        %v1457 = vpop.f32.mrb[0].mxu0
        %v1458 = vadd.f32 %v1281, %v1457
        %v1459 = vpop.f32.mrb[0].mxu0
        %1460 = vmatprep.mubr.f32.mxu0 0.0
        %v1461 = vand.u32 %v189, 4294901760
        %1462 = vmatmul.mubr.f32.gmra.mrb[0].mxu0 %v1461
        %v1463 = vpop.f32.mrb[0].mxu0
        %v1464 = vadd.f32 %v1287, %v1463
        %v1465 = vpop.f32.mrb[0].mxu0
        %1466 = vmatprep.mubr.f32.mxu0 0.0
        %v1467 = vand.u32 %v190, 4294901760
        %1468 = vmatmul.mubr.f32.gmra.mrb[0].mxu0 %v1467
        %v1469 = vpop.f32.mrb[0].mxu0
        %v1470 = vadd.f32 %v1293, %v1469
        %v1471 = vpop.f32.mrb[0].mxu0
        %1472 = vmatprep.mubr.f32.mxu0 0.0
        %v1473 = vand.u32 %v191, 4294901760
        %1474 = vmatmul.mubr.f32.gmra.mrb[0].mxu0 %v1473
        %v1475 = vpop.f32.mrb[0].mxu0
        %v1476 = vadd.f32 %v1299, %v1475
        %v1477 = vpop.f32.mrb[0].mxu0
        %1478 = vmatprep.mubr.f32.mxu0 0.0
        %v1479 = vand.u32 %v192, 4294901760
        %1480 = vmatmul.mubr.f32.gmra.mrb[0].mxu0 %v1479
        %v1481 = vpop.f32.mrb[0].mxu0
        %v1482 = vadd.f32 %v1305, %v1481
        %v1483 = vpop.f32.mrb[0].mxu0
        %1484 = vmatprep.mubr.f32.mxu0 0.0
        %v1485 = vand.u32 %v193, 4294901760
        %1486 = vmatmul.mubr.f32.gmra.mrb[0].mxu0 %v1485
        %v1487 = vpop.f32.mrb[0].mxu0
        %v1488 = vadd.f32 %v1311, %v1487
        %v1489 = vpop.f32.mrb[0].mxu0
        %1490 = vmatprep.mubr.f32.mxu0 0.0
        %v1491 = vand.u32 %v194, 4294901760
        %1492 = vmatmul.mubr.f32.gmra.mrb[0].mxu0 %v1491
        %v1493 = vpop.f32.mrb[0].mxu0
        %v1494 = vadd.f32 %v1317, %v1493
        %v1495 = vpop.f32.mrb[0].mxu0
        %1496 = vdwg.mxu0
        %1497 = vst [vmem:[%s176] sm:$0xff] %v1404
        %1498 = vst [vmem:[%s176 + $0x8] sm:$0xff] %v1410
        %1499 = vst [vmem:[%s176 + $0x10] sm:$0xff] %v1416
        %1500 = vst [vmem:[%s176 + $0x18] sm:$0xff] %v1422
        %1501 = vst [vmem:[%s176 + $0x20] sm:$0xff] %v1428
        %1502 = vst [vmem:[%s176 + $0x28] sm:$0xff] %v1434
        %1503 = vst [vmem:[%s176 + $0x30] sm:$0xff] %v1440
        %1504 = vst [vmem:[%s176 + $0x38] sm:$0xff] %v1446
        %1505 = vst [vmem:[%s176 + $0x40] sm:$0xff] %v1452
        %1506 = vst [vmem:[%s176 + $0x48] sm:$0xff] %v1458
        %1507 = vst [vmem:[%s176 + $0x50] sm:$0xff] %v1464
        %1508 = vst [vmem:[%s176 + $0x58] sm:$0xff] %v1470
        %1509 = vst [vmem:[%s176 + $0x60] sm:$0xff] %v1476
        %1510 = vst [vmem:[%s176 + $0x68] sm:$0xff] %v1482
        %1511 = vst [vmem:[%s176 + $0x70] sm:$0xff] %v1488
        %1512 = vst [vmem:[%s176 + $0x78] sm:$0xff] %v1494
        %s1513 = sand.u32 %s75, 1
        %s1514 = scalar_lea.sflag [#allocation4], %s1513
        %s1515 = sand.u32 %s75, 1
        %s1516 = smul.addr %s1515, 128
        %s1517 = scalar_lea.vmem [#allocation7], %s1516
        // Predicated region
        $region37: #{tpu_custom_call.1} parent=27 // pred_check
          %p1518 = pneg %p85
        $region38: #{tpu_custom_call.1} parent=27 // pred_check_branch
          %1520 = sbr.rel (%p1518) target = $region40
        $region39: #{tpu_custom_call.1} parent=27 // pred_region
          %s1521 = smul.u32 16, %s20
          %s1523 = ssub.s32 2048, 2048
          %1524 = vsyncadd %s1514, %s1523
          %s1525 = smul.addr %s1521, 128
          %s1526 = scalar_lea.hbm %s2, %s1525
          %s1527 = sshll.u32 %s1517, 4
          %s1528 = int_to_ptr.vmem [resolvable:$true] %s1527
          %1533 = dma.vmem_to_hbm [thread:$0]  %s1528, 2048, %s1526, %s1514, 128, 128, 8
        $region40: #{tpu_custom_call.1} parent=27 // pred_fallthru
          _
      $region28: #{tpu_custom_call.1} parent=5 // pred_fallthru
        _
      %p1534 = scmp.le.s32.totalorder 2, %s15
      // Predicated region
      $region41: #{tpu_custom_call.1} parent=5 // pred_check
        %p1535 = pneg %p1534
      $region42: #{tpu_custom_call.1} parent=5 // pred_check_branch
        %1537 = sbr.rel (%p1535) target = $region44
      $region43: #{tpu_custom_call.1} parent=5 // pred_region
        %s1538 = ssub.s32 %s15, 2
        // Predicated region
        $region45: #{tpu_custom_call.1} parent=43 // pred_check
          %p1539 = pneg %p91
        $region46: #{tpu_custom_call.1} parent=43 // pred_check_branch
          %1541 = sbr.rel (%p1539) target = $region48
        $region47: #{tpu_custom_call.1} parent=43 // pred_region
          %s1542 = sand.u32 %s76, 1
          %s1543 = scalar_lea.sflag [#allocation4], %s1542
          %s1544 = sand.u32 %s76, 1
          %s1545 = smul.addr %s1544, 128
          %s1546 = scalar_lea.vmem [#allocation7], %s1545
          %1547 = dma.done %s1543, 2048
        $region48: #{tpu_custom_call.1} parent=43 // pred_fallthru
          _
      $region44: #{tpu_custom_call.1} parent=5 // pred_fallthru
        _
    $region6: #{tpu_custom_call.1} parent=1 // loop_footer
      %s19 = sadd.s32 1, %s15
    $region7: #{tpu_custom_call.1} parent=1 // loop_footer_branch
      %14 = sbr.rel target = $region3
    $region8: #{tpu_custom_call.1} parent=1 // loop_exit
      _
    %1548 = vsyncpa [#allocation3], 1
    %s1549 = scalar_lea.sflag [#allocation3], 1
    %1550 = vsyncpa %s1549, 1
    %1551 = vsyncpa [#allocation6], 1
    %1552 = vsyncpa [#allocation4], 1
    %s1553 = scalar_lea.sflag [#allocation4], 1
    %1554 = vsyncpa %s1553, 1

</llo_original>
